<compile_context>
chip_gen: v5e
topology: v5e:2x2
jax: 0.10.0
libtpu: 0.0.40
codegen_flags: <defaults>
</compile_context>

<pallas_src>
import functools

import jax
import jax.numpy as jnp
from jax import lax
from jax.experimental import pallas as pl
from jax.experimental.pallas import tpu as pltpu


TM = 128        # node-row tile (multiple of 8/16 sublanes, fits all generations)
F_IN = 640
F_HID = 64
F_OUT = 640


# ---------------------------------------------------------------------------
# Fused 3-layer GCN kernel.
# Grid = (4 phases, T row tiles); phases run sequentially, tiles inner:
#   p=0: h_a[tile] = X[tile] @ W1                       (project layer 1)
#   p=1: h_b[tile] = relu(A[tile,:] @ h_a + b1) @ W2    (aggregate 1 + project 2)
#   p=2: h_a[tile] = relu(A[tile,:] @ h_b + b2)         (aggregate 2 -> h2)
#   p=3: out[tile] = (A[tile,:] @ h_a) @ W3 + b3        (aggregate-then-project)
# h_a / h_b are (N_pad, 64) bf16 VMEM scratch persisted across the whole grid.
# ---------------------------------------------------------------------------
def fused_gcn_kernel(x_ref, a_ref, w1_ref, b1_ref, w2_ref, b2_ref,
                     w3_ref, b3_ref, o_ref, h_a, h_b, *, tm):
    p = pl.program_id(0)
    i = pl.program_id(1)
    row0 = pl.multiple_of(i * tm, tm)

    @pl.when(p == 0)
    def _project1():
        xw = jnp.dot(x_ref[...], w1_ref[...], preferred_element_type=jnp.float32)
        h_a[pl.ds(row0, tm), :] = xw.astype(h_a.dtype)

    @pl.when(p == 1)
    def _aggregate1_project2():
        agg = jnp.dot(a_ref[...], h_a[...], preferred_element_type=jnp.float32)
        h1 = jnp.maximum(agg + b1_ref[...], 0.0)
        p2 = jnp.dot(h1.astype(w2_ref.dtype), w2_ref[...],
                     preferred_element_type=jnp.float32)
        h_b[pl.ds(row0, tm), :] = p2.astype(h_b.dtype)

    @pl.when(p == 2)
    def _aggregate2():
        agg = jnp.dot(a_ref[...], h_b[...], preferred_element_type=jnp.float32)
        h2 = jnp.maximum(agg + b2_ref[...], 0.0)
        h_a[pl.ds(row0, tm), :] = h2.astype(h_a.dtype)

    @pl.when(p == 3)
    def _aggregate3_project3():
        agg = jnp.dot(a_ref[...], h_a[...], preferred_element_type=jnp.float32)
        out = jnp.dot(agg.astype(w3_ref.dtype), w3_ref[...],
                      preferred_element_type=jnp.float32)
        o_ref[...] = (out + b3_ref[...]).astype(o_ref.dtype)


# ---------------------------------------------------------------------------
# Glue: edge list -> dense symmetric-normalized adjacency with self loops
# (matches PyG gcn_norm; kernel sees A_hat[dst, src]).
# ---------------------------------------------------------------------------
def build_normalized_adjacency(edges, num_nodes):
    src = edges[:, 0]
    dst = edges[:, 1]
    adj = jnp.zeros((num_nodes, num_nodes), jnp.float32)
    adj = adj.at[dst, src].add(1.0)
    adj = adj + jnp.eye(num_nodes, dtype=jnp.float32)
    deg = adj.sum(axis=1)
    dinv = jnp.where(deg > 0, lax.rsqrt(deg), 0.0)
    return dinv[:, None] * adj * dinv[None, :]


# ---------------------------------------------------------------------------
# Forward pass
# ---------------------------------------------------------------------------
def gnn_forward(params, x, edges):
    n, f_in = x.shape
    n_pad = ((n + TM - 1) // TM) * TM
    n_tiles = n_pad // TM

    a_hat = build_normalized_adjacency(edges, n)
    # bf16 MXU operands; zero padding keeps padded rows/cols from contaminating
    # real rows (padded columns of A_hat are 0 for every real row).
    a_pad = jnp.zeros((n_pad, n_pad), jnp.bfloat16).at[:n, :n].set(
        a_hat.astype(jnp.bfloat16))
    x_pad = jnp.zeros((n_pad, f_in), jnp.bfloat16).at[:n, :].set(
        x.astype(jnp.bfloat16))

    w1 = params["w1"].astype(jnp.bfloat16)
    w2 = params["w2"].astype(jnp.bfloat16)
    w3 = params["w3"].astype(jnp.bfloat16)
    b1 = params["b1"].reshape(1, F_HID).astype(jnp.float32)
    b2 = params["b2"].reshape(1, F_HID).astype(jnp.float32)
    b3 = params["b3"].reshape(1, F_OUT).astype(jnp.float32)

    # Conditional index maps: only re-DMA the blocks a phase actually consumes.
    x_map = lambda p, i: (jnp.where(p == 0, i, 0), 0)   # X rows only in phase 0
    a_map = lambda p, i: (jnp.where(p == 0, 0, i), 0)   # A rows in phases 1,2,3
    o_map = lambda p, i: (jnp.where(p == 3, i, 0), 0)   # output written in phase 3
    const_map = lambda p, i: (0, 0)                     # small weights/biases

    # Explicit VMEM budget (double-buffered blocks + persistent scratch),
    # clamped to 64 MiB so it is valid on v7x as well as v5e/v6e.
    blk_bytes = 2 * (TM * f_in * 2 + TM * n_pad * 2 + TM * F_OUT * 4)
    wgt_bytes = 2 * (2 * (f_in * F_HID + F_HID * F_HID + F_HID * F_OUT)
                     + 4 * (F_HID + F_HID + F_OUT))
    scr_bytes = 2 * n_pad * F_HID * 2
    vmem_bytes = int(min(max(blk_bytes + wgt_bytes + scr_bytes + (4 << 20),
                             32 << 20), 64 << 20))

    out_pad = pl.pallas_call(
        functools.partial(fused_gcn_kernel, tm=TM),
        out_shape=jax.ShapeDtypeStruct((n_pad, F_OUT), jnp.float32),
        grid_spec=pltpu.PrefetchScalarGridSpec(
            num_scalar_prefetch=0,
            grid=(4, n_tiles),
            in_specs=[
                pl.BlockSpec((TM, f_in), x_map),        # X (padded, bf16)
                pl.BlockSpec((TM, n_pad), a_map),       # A_hat row slab (bf16)
                pl.BlockSpec((f_in, F_HID), const_map),   # W1
                pl.BlockSpec((1, F_HID), const_map),      # b1
                pl.BlockSpec((F_HID, F_HID), const_map),  # W2
                pl.BlockSpec((1, F_HID), const_map),      # b2
                pl.BlockSpec((F_HID, F_OUT), const_map),  # W3
                pl.BlockSpec((1, F_OUT), const_map),      # b3
            ],
            out_specs=pl.BlockSpec((TM, F_OUT), o_map),
            scratch_shapes=[
                pltpu.VMEM((n_pad, F_HID), jnp.bfloat16),  # h_a
                pltpu.VMEM((n_pad, F_HID), jnp.bfloat16),  # h_b
            ],
        ),
        compiler_params=pltpu.CompilerParams(
            # Tiles share the VMEM-resident intermediates across phases, so the
            # tile axis must stay sequential (cannot be core-parallel here).
            dimension_semantics=("arbitrary", "arbitrary"),
            vmem_limit_bytes=vmem_bytes,
        ),
    )(x_pad, a_pad, w1, b1, w2, b2, w3, b3)

    return out_pad[:n]


def init_params(key):
    def glorot(k, fin, fout):
        lim = (6.0 / (fin + fout)) ** 0.5
        return jax.random.uniform(k, (fin, fout), jnp.float32, -lim, lim)

    k1, k2, k3 = jax.random.split(key, 3)
    return {
        "w1": glorot(k1, F_IN, F_HID), "b1": jnp.zeros((F_HID,), jnp.float32),
        "w2": glorot(k2, F_HID, F_HID), "b2": jnp.zeros((F_HID,), jnp.float32),
        "w3": glorot(k3, F_HID, F_OUT), "b3": jnp.zeros((F_OUT,), jnp.float32),
    }


# Pure-JAX f32 reference (semantics of the PyTorch module).
def gnn_forward_ref(params, x, edges):
    a_hat = build_normalized_adjacency(edges, x.shape[0])
    h = jnp.maximum(a_hat @ (x @ params["w1"]) + params["b1"], 0.0)
    h = jnp.maximum(a_hat @ (h @ params["w2"]) + params["b2"], 0.0)
    return a_hat @ (h @ params["w3"]) + params["b3"]


if __name__ == "__main__":
    key = jax.random.PRNGKey(0)
    k_param, k_x, k_e = jax.random.split(key, 3)

    N = 200      # graph nodes (pads to 256 -> 2 row tiles, exercises tiled path)
    E = 600      # directed edges

    params = init_params(k_param)
    x = jax.random.normal(k_x, (N, F_IN), jnp.float32)
    edges = jax.random.randint(k_e, (E, 2), 0, N, jnp.int32)   # module uses edges.T

    out = jax.jit(gnn_forward)(params, x, edges)
    out = jax.block_until_ready(out)

    ref = gnn_forward_ref(params, x, edges)
    assert out.shape == (N, F_OUT), out.shape
    # Kernel uses bf16 MXU operands with f32 accumulation, so compare against the
    # pure-f32 reference with a bf16-appropriate tolerance.
    rel_err = float(jnp.max(jnp.abs(out - ref)) / (jnp.max(jnp.abs(ref)) + 1e-6))
    assert rel_err < 5e-2, f"mismatch vs reference: rel-max-err={rel_err}"

    print("KERNEL_OK")
</pallas_src>

<mosaic_0001>
module attributes {stable_mosaic.version = 11 : i64} {
  func.func @fused_gcn_kernel(%arg0: i32, %arg1: i32, %arg2: memref<128x640xbf16, #tpu.memory_space<vmem>>, %arg3: memref<128x256xbf16, #tpu.memory_space<vmem>>, %arg4: memref<640x64xbf16, #tpu.memory_space<vmem>>, %arg5: memref<1x64xf32, #tpu.memory_space<vmem>>, %arg6: memref<64x64xbf16, #tpu.memory_space<vmem>>, %arg7: memref<1x64xf32, #tpu.memory_space<vmem>>, %arg8: memref<64x640xbf16, #tpu.memory_space<vmem>>, %arg9: memref<1x640xf32, #tpu.memory_space<vmem>>, %arg10: memref<128x640xf32, #tpu.memory_space<vmem>>, %arg11: memref<256x64xbf16, #tpu.memory_space<vmem>>, %arg12: memref<256x64xbf16, #tpu.memory_space<vmem>>) attributes {dimension_semantics = [#tpu.dimension_semantics<arbitrary>, #tpu.dimension_semantics<arbitrary>], iteration_bounds = array<i64: 4, 2>, scalar_prefetch = 0 : i64, scratch_operands = 2 : i64, tpu.core_type = #tpu.core_type<tc>, window_params = [{transform_indices = @transform_0, window_bounds = array<i64: 128, 640>}, {transform_indices = @transform_1, window_bounds = array<i64: 128, 256>}, {pipeline_mode = #tpu.pipeline_mode<synchronous>, transform_indices = @transform_2, window_bounds = array<i64: 640, 64>}, {pipeline_mode = #tpu.pipeline_mode<synchronous>, transform_indices = @transform_3, window_bounds = array<i64: 1, 64>}, {pipeline_mode = #tpu.pipeline_mode<synchronous>, transform_indices = @transform_4, window_bounds = array<i64: 64, 64>}, {pipeline_mode = #tpu.pipeline_mode<synchronous>, transform_indices = @transform_5, window_bounds = array<i64: 1, 64>}, {pipeline_mode = #tpu.pipeline_mode<synchronous>, transform_indices = @transform_6, window_bounds = array<i64: 64, 640>}, {pipeline_mode = #tpu.pipeline_mode<synchronous>, transform_indices = @transform_7, window_bounds = array<i64: 1, 640>}, {transform_indices = @transform_8, window_bounds = array<i64: 128, 640>}]} {
    %c128_i32 = arith.constant 128 : i32
    %0 = arith.muli %arg1, %c128_i32 : i32
    %1 = tpu.assume_multiple %0, 128 : i32
    %c0_i32 = arith.constant 0 : i32
    %2 = arith.cmpi eq, %arg0, %c0_i32 : i32
    %3 = arith.extui %2 : i1 to i32
    %c0_i32_0 = arith.constant 0 : i32
    %4 = arith.cmpi ne, %3, %c0_i32_0 : i32
    scf.if %4 {
      %c0 = arith.constant 0 : index
      %c0_4 = arith.constant 0 : index
      %14 = vector.load %arg2[%c0, %c0_4] : memref<128x640xbf16, #tpu.memory_space<vmem>>, vector<128x640xbf16>
      %c0_5 = arith.constant 0 : index
      %c0_6 = arith.constant 0 : index
      %15 = vector.load %arg4[%c0_5, %c0_6] : memref<640x64xbf16, #tpu.memory_space<vmem>>, vector<640x64xbf16>
      %cst = arith.constant dense<0.000000e+00> : vector<128x64xf32>
      %16 = tpu.matmul %14, %15, %cst {dimension_numbers = #tpu.dot_dimension_numbers<[1], [0], [0], [1], [0, 0, 1, 1], [], []>} : vector<128x640xbf16>, vector<640x64xbf16>, vector<128x64xf32> -> vector<128x64xf32>
      %17 = arith.truncf %16 : vector<128x64xf32> to vector<128x64xbf16>
      %18 = arith.index_cast %1 : i32 to index
      %c0_7 = arith.constant 0 : index
      %19 = vector.load %arg11[%18, %c0_7] : memref<256x64xbf16, #tpu.memory_space<vmem>>, vector<128x64xbf16>
      tpu.vector_store %arg11[%18, %c0_7], %17 {strides = array<i32>} : memref<256x64xbf16, #tpu.memory_space<vmem>>, vector<128x64xbf16>,
    } else {
    }
    %c1_i32 = arith.constant 1 : i32
    %5 = arith.cmpi eq, %arg0, %c1_i32 : i32
    %6 = arith.extui %5 : i1 to i32
    %c0_i32_1 = arith.constant 0 : i32
    %7 = arith.cmpi ne, %6, %c0_i32_1 : i32
    scf.if %7 {
      %c0 = arith.constant 0 : index
      %c0_4 = arith.constant 0 : index
      %14 = vector.load %arg3[%c0, %c0_4] : memref<128x256xbf16, #tpu.memory_space<vmem>>, vector<128x256xbf16>
      %c0_5 = arith.constant 0 : index
      %c0_6 = arith.constant 0 : index
      %15 = vector.load %arg11[%c0_5, %c0_6] : memref<256x64xbf16, #tpu.memory_space<vmem>>, vector<256x64xbf16>
      %cst = arith.constant dense<0.000000e+00> : vector<128x64xf32>
      %16 = tpu.matmul %14, %15, %cst {dimension_numbers = #tpu.dot_dimension_numbers<[1], [0], [0], [1], [0, 0, 1, 1], [], []>} : vector<128x256xbf16>, vector<256x64xbf16>, vector<128x64xf32> -> vector<128x64xf32>
      %c0_7 = arith.constant 0 : index
      %c0_8 = arith.constant 0 : index
      %17 = vector.load %arg5[%c0_7, %c0_8] : memref<1x64xf32, #tpu.memory_space<vmem>>, vector<1x64xf32>
      %18 = vector.broadcast %17 : vector<1x64xf32> to vector<128x64xf32>
      %19 = arith.addf %16, %18 : vector<128x64xf32>
      %cst_9 = arith.constant 0.000000e+00 : f32
      %20 = vector.broadcast %cst_9 : f32 to vector<128x64xf32>
      %21 = arith.maximumf %19, %20 : vector<128x64xf32>
      %22 = arith.truncf %21 : vector<128x64xf32> to vector<128x64xbf16>
      %c0_10 = arith.constant 0 : index
      %c0_11 = arith.constant 0 : index
      %23 = vector.load %arg6[%c0_10, %c0_11] : memref<64x64xbf16, #tpu.memory_space<vmem>>, vector<64x64xbf16>
      %cst_12 = arith.constant dense<0.000000e+00> : vector<128x64xf32>
      %24 = tpu.matmul %22, %23, %cst_12 {dimension_numbers = #tpu.dot_dimension_numbers<[1], [0], [0], [1], [0, 0, 1, 1], [], []>} : vector<128x64xbf16>, vector<64x64xbf16>, vector<128x64xf32> -> vector<128x64xf32>
      %25 = arith.truncf %24 : vector<128x64xf32> to vector<128x64xbf16>
      %26 = arith.index_cast %1 : i32 to index
      %c0_13 = arith.constant 0 : index
      %27 = vector.load %arg12[%26, %c0_13] : memref<256x64xbf16, #tpu.memory_space<vmem>>, vector<128x64xbf16>
      tpu.vector_store %arg12[%26, %c0_13], %25 {strides = array<i32>} : memref<256x64xbf16, #tpu.memory_space<vmem>>, vector<128x64xbf16>,
    } else {
    }
    %c2_i32 = arith.constant 2 : i32
    %8 = arith.cmpi eq, %arg0, %c2_i32 : i32
    %9 = arith.extui %8 : i1 to i32
    %c0_i32_2 = arith.constant 0 : i32
    %10 = arith.cmpi ne, %9, %c0_i32_2 : i32
    scf.if %10 {
      %c0 = arith.constant 0 : index
      %c0_4 = arith.constant 0 : index
      %14 = vector.load %arg3[%c0, %c0_4] : memref<128x256xbf16, #tpu.memory_space<vmem>>, vector<128x256xbf16>
      %c0_5 = arith.constant 0 : index
      %c0_6 = arith.constant 0 : index
      %15 = vector.load %arg12[%c0_5, %c0_6] : memref<256x64xbf16, #tpu.memory_space<vmem>>, vector<256x64xbf16>
      %cst = arith.constant dense<0.000000e+00> : vector<128x64xf32>
      %16 = tpu.matmul %14, %15, %cst {dimension_numbers = #tpu.dot_dimension_numbers<[1], [0], [0], [1], [0, 0, 1, 1], [], []>} : vector<128x256xbf16>, vector<256x64xbf16>, vector<128x64xf32> -> vector<128x64xf32>
      %c0_7 = arith.constant 0 : index
      %c0_8 = arith.constant 0 : index
      %17 = vector.load %arg7[%c0_7, %c0_8] : memref<1x64xf32, #tpu.memory_space<vmem>>, vector<1x64xf32>
      %18 = vector.broadcast %17 : vector<1x64xf32> to vector<128x64xf32>
      %19 = arith.addf %16, %18 : vector<128x64xf32>
      %cst_9 = arith.constant 0.000000e+00 : f32
      %20 = vector.broadcast %cst_9 : f32 to vector<128x64xf32>
      %21 = arith.maximumf %19, %20 : vector<128x64xf32>
      %22 = arith.truncf %21 : vector<128x64xf32> to vector<128x64xbf16>
      %23 = arith.index_cast %1 : i32 to index
      %c0_10 = arith.constant 0 : index
      %24 = vector.load %arg11[%23, %c0_10] : memref<256x64xbf16, #tpu.memory_space<vmem>>, vector<128x64xbf16>
      tpu.vector_store %arg11[%23, %c0_10], %22 {strides = array<i32>} : memref<256x64xbf16, #tpu.memory_space<vmem>>, vector<128x64xbf16>,
    } else {
    }
    %c3_i32 = arith.constant 3 : i32
    %11 = arith.cmpi eq, %arg0, %c3_i32 : i32
    %12 = arith.extui %11 : i1 to i32
    %c0_i32_3 = arith.constant 0 : i32
    %13 = arith.cmpi ne, %12, %c0_i32_3 : i32
    scf.if %13 {
      %c0 = arith.constant 0 : index
      %c0_4 = arith.constant 0 : index
      %14 = vector.load %arg3[%c0, %c0_4] : memref<128x256xbf16, #tpu.memory_space<vmem>>, vector<128x256xbf16>
      %c0_5 = arith.constant 0 : index
      %c0_6 = arith.constant 0 : index
      %15 = vector.load %arg11[%c0_5, %c0_6] : memref<256x64xbf16, #tpu.memory_space<vmem>>, vector<256x64xbf16>
      %cst = arith.constant dense<0.000000e+00> : vector<128x64xf32>
      %16 = tpu.matmul %14, %15, %cst {dimension_numbers = #tpu.dot_dimension_numbers<[1], [0], [0], [1], [0, 0, 1, 1], [], []>} : vector<128x256xbf16>, vector<256x64xbf16>, vector<128x64xf32> -> vector<128x64xf32>
      %17 = arith.truncf %16 : vector<128x64xf32> to vector<128x64xbf16>
      %c0_7 = arith.constant 0 : index
      %c0_8 = arith.constant 0 : index
      %18 = vector.load %arg8[%c0_7, %c0_8] : memref<64x640xbf16, #tpu.memory_space<vmem>>, vector<64x640xbf16>
      %cst_9 = arith.constant dense<0.000000e+00> : vector<128x640xf32>
      %19 = tpu.matmul %17, %18, %cst_9 {dimension_numbers = #tpu.dot_dimension_numbers<[1], [0], [0], [1], [0, 0, 1, 1], [], []>} : vector<128x64xbf16>, vector<64x640xbf16>, vector<128x640xf32> -> vector<128x640xf32>
      %c0_10 = arith.constant 0 : index
      %c0_11 = arith.constant 0 : index
      %20 = vector.load %arg9[%c0_10, %c0_11] : memref<1x640xf32, #tpu.memory_space<vmem>>, vector<1x640xf32>
      %21 = vector.broadcast %20 : vector<1x640xf32> to vector<128x640xf32>
      %22 = arith.addf %19, %21 : vector<128x640xf32>
      %c0_12 = arith.constant 0 : index
      %c0_13 = arith.constant 0 : index
      %23 = vector.load %arg10[%c0_12, %c0_13] : memref<128x640xf32, #tpu.memory_space<vmem>>, vector<128x640xf32>
      tpu.vector_store %arg10[%c0_12, %c0_13], %22 {strides = array<i32>} : memref<128x640xf32, #tpu.memory_space<vmem>>, vector<128x640xf32>,
    } else {
    }
    return
  }
  func.func @transform_0(%arg0: i32, %arg1: i32) -> (i32, i32) {
    %c0_i32 = arith.constant 0 : i32
    %0 = arith.cmpi eq, %arg0, %c0_i32 : i32
    %c0_i32_0 = arith.constant 0 : i32
    %1 = arith.select %0, %arg1, %c0_i32_0 : i32
    %c0_i32_1 = arith.constant 0 : i32
    %c0_i32_2 = arith.constant 0 : i32
    return %1, %c0_i32_1 : i32, i32
  }
  func.func @transform_1(%arg0: i32, %arg1: i32) -> (i32, i32) {
    %c0_i32 = arith.constant 0 : i32
    %0 = arith.cmpi eq, %arg0, %c0_i32 : i32
    %c0_i32_0 = arith.constant 0 : i32
    %1 = arith.select %0, %c0_i32_0, %arg1 : i32
    %c0_i32_1 = arith.constant 0 : i32
    %c0_i32_2 = arith.constant 0 : i32
    return %1, %c0_i32_1 : i32, i32
  }
  func.func @transform_2(%arg0: i32, %arg1: i32) -> (i32, i32) {
    %c0_i32 = arith.constant 0 : i32
    %c0_i32_0 = arith.constant 0 : i32
    %c0_i32_1 = arith.constant 0 : i32
    return %c0_i32, %c0_i32_0 : i32, i32
  }
  func.func @transform_3(%arg0: i32, %arg1: i32) -> (i32, i32) {
    %c0_i32 = arith.constant 0 : i32
    %c0_i32_0 = arith.constant 0 : i32
    %c0_i32_1 = arith.constant 0 : i32
    return %c0_i32, %c0_i32_0 : i32, i32
  }
  func.func @transform_4(%arg0: i32, %arg1: i32) -> (i32, i32) {
    %c0_i32 = arith.constant 0 : i32
    %c0_i32_0 = arith.constant 0 : i32
    %c0_i32_1 = arith.constant 0 : i32
    return %c0_i32, %c0_i32_0 : i32, i32
  }
  func.func @transform_5(%arg0: i32, %arg1: i32) -> (i32, i32) {
    %c0_i32 = arith.constant 0 : i32
    %c0_i32_0 = arith.constant 0 : i32
    %c0_i32_1 = arith.constant 0 : i32
    return %c0_i32, %c0_i32_0 : i32, i32
  }
  func.func @transform_6(%arg0: i32, %arg1: i32) -> (i32, i32) {
    %c0_i32 = arith.constant 0 : i32
    %c0_i32_0 = arith.constant 0 : i32
    %c0_i32_1 = arith.constant 0 : i32
    return %c0_i32, %c0_i32_0 : i32, i32
  }
  func.func @transform_7(%arg0: i32, %arg1: i32) -> (i32, i32) {
    %c0_i32 = arith.constant 0 : i32
    %c0_i32_0 = arith.constant 0 : i32
    %c0_i32_1 = arith.constant 0 : i32
    return %c0_i32, %c0_i32_0 : i32, i32
  }
  func.func @transform_8(%arg0: i32, %arg1: i32) -> (i32, i32) {
    %c3_i32 = arith.constant 3 : i32
    %0 = arith.cmpi eq, %arg0, %c3_i32 : i32
    %c0_i32 = arith.constant 0 : i32
    %1 = arith.select %0, %arg1, %c0_i32 : i32
    %c0_i32_0 = arith.constant 0 : i32
    %c0_i32_1 = arith.constant 0 : i32
    return %1, %c0_i32_0 : i32, i32
  }
}

</mosaic_0001>

<llo_original>
// kernel: gnn_forward.1
$region0: #{gnn_forward.1}
  #allocation0 [shape = 'u32[]', space=smem, size = 0x4, offset = 0x4, fixed_abs, tag = 'smem constant byte address 0x4 - core index']
  #allocation1 [shape = 'u32[72,128]{1,0:T(1,128)}', space=vmem, size = 0x9000, scoped, tag = 'internal scratch']
  #allocation2 [shape = 'bf16[256,64]{1,0:T(8,128)(2,1)}', space=vmem, size = 0x10000, scoped, tag = 'scratch operand']
  #allocation3 [shape = 'bf16[256,64]{1,0:T(8,128)(2,1)}', space=vmem, size = 0x10000, scoped, tag = 'scratch operand']
  %s0 = inlined_call_operand.vmem [shape: bf16[256,640], index: 0, kind: input, shape index: {}]
  %s1 = inlined_call_operand.vmem [shape: bf16[256,256], index: 1, kind: input, shape index: {}]
  %s2 = inlined_call_operand.vmem [shape: bf16[640,64], index: 2, kind: input, shape index: {}]
  %s3 = inlined_call_operand.vmem [shape: f32[1,64], index: 3, kind: input, shape index: {}]
  %s4 = inlined_call_operand.vmem [shape: bf16[64,64], index: 4, kind: input, shape index: {}]
  %s5 = inlined_call_operand.vmem [shape: f32[1,64], index: 5, kind: input, shape index: {}]
  %s6 = inlined_call_operand.vmem [shape: bf16[64,640], index: 6, kind: input, shape index: {}]
  %s7 = inlined_call_operand.vmem [shape: f32[1,640], index: 7, kind: input, shape index: {}]
  %s8 = inlined_call_operand.vmem [shape: f32[256,640], index: 8, kind: output, shape index: {}]
  %s9 = sld [smem:[#allocation0]]
  $region81: #{gnn_forward.1} parent=0
    _
  %s11 = ssub.s32 1, %s9
  %s12 = scalar_select 0, %s11, %s9
  loop: start=0, step=1, limit=10
  $region2: #{gnn_forward.1} parent=0 // loop_pre_header
    _
  $region3: #{gnn_forward.1} parent=0 // loop_header
    %s14 = sphi 0, %s18
    %p15 = scmp.ge.s32.totalorder %s14, 10
    %s21 = sphi 0, %s33
    %s22 = sphi 0, %s29
    %s23 = sphi 0, %s21
    %s24 = sphi 0, %s22
    %s25 = sphi 0, %s23
    %s26 = sphi 0, %s24
    %s40 = sphi 0, %s42
    %s43 = sphi 0, %s40
    %s44 = sphi 0, %s43
    %s60 = sphi 0, %s44
    %s70 = sphi 0, %s72
    %s73 = sphi 0, %s70
    %s74 = sphi 0, %s73
    %s90 = sphi 0, %s74
    %s94 = sphi 0, %s94
    %s96 = sphi 0, %s94
    %s97 = sphi 0, %s96
    %s111 = sphi 0, %s97
    %s115 = sphi 0, %s115
    %s117 = sphi 0, %s115
    %s118 = sphi 0, %s117
    %s132 = sphi 0, %s118
    %s136 = sphi 0, %s136
    %s138 = sphi 0, %s136
    %s139 = sphi 0, %s138
    %s153 = sphi 0, %s139
    %s157 = sphi 0, %s157
    %s159 = sphi 0, %s157
    %s160 = sphi 0, %s159
    %s174 = sphi 0, %s160
    %s178 = sphi 0, %s178
    %s180 = sphi 0, %s178
    %s181 = sphi 0, %s180
    %s195 = sphi 0, %s181
    %s199 = sphi 0, %s199
    %s201 = sphi 0, %s199
    %s202 = sphi 0, %s201
    %s216 = sphi 0, %s202
    %s226 = sphi 0, %s228
    %s229 = sphi 0, %s226
    %s230 = sphi 0, %s229
    %s246 = sphi 0, %s230
  $region4: #{gnn_forward.1} parent=0 // loop_header_branch
    %17 = sbr.rel (%p15) target = $region8
  $region5: #{gnn_forward.1} parent=0 // loop_body
    %s19 = ssub.s32 %s14, 1
    %s20 = ssub.s32 %s14, 2
    %s27 = sadd.s32 1, %s22
    %p28 = scmp.ge.s32.totalorder %s27, 2
    %s29 = scalar_select %p28, 0, %s27
    %s30 = sadd.s32 1, %s21
    %s31 = scalar_select %p28, %s30, %s21
    %p32 = scmp.ge.s32.totalorder %s31, 4
    %s33 = scalar_select %p32, 0, %s31
    %p34 = scmp.eq.s32.totalorder %s21, 0
    %s35 = scalar_select %p34, %s22, 0
    %p36 = scmp.eq.s32.totalorder %s33, 0
    %s37 = scalar_select %p36, %s29, 0
    %s38 = ssub.s32 %s35, %s37
    %p39 = scmp.eq.s32.totalorder %s38, 0
    %s41 = sadd.s32 %s40, 1
    %s42 = scalar_select %p39, %s40, %s41
    %p45 = pneg %p39
    %p46 = scmp.eq.s32.totalorder %s14, 7
    %p47 = por %p45, %p46
    %p48 = scmp.ne.s32.totalorder %s40, %s43
    %p49 = scmp.eq.s32.totalorder %s14, 0
    %p50 = por %p48, %p49
    %p51 = scmp.ne.s32.totalorder %s40, %s43
    %p52 = scmp.eq.s32.totalorder %s19, 7
    %p53 = por %p51, %p52
    %p54 = scmp.ne.s32.totalorder %s43, %s44
    %p55 = scmp.eq.s32.totalorder %s19, 0
    %p56 = por %p54, %p55
    %p57 = scmp.ne.s32.totalorder %s43, %s44
    %p58 = scmp.eq.s32.totalorder %s20, 7
    %p59 = por %p57, %p58
    %p61 = scmp.ne.s32.totalorder %s44, %s60
    %p62 = scmp.eq.s32.totalorder %s20, 0
    %p63 = por %p61, %p62
    %p64 = scmp.eq.s32.totalorder %s21, 0
    %s65 = scalar_select %p64, 0, %s22
    %p66 = scmp.eq.s32.totalorder %s33, 0
    %s67 = scalar_select %p66, 0, %s29
    %s68 = ssub.s32 %s65, %s67
    %p69 = scmp.eq.s32.totalorder %s68, 0
    %s71 = sadd.s32 %s70, 1
    %s72 = scalar_select %p69, %s70, %s71
    %p75 = pneg %p69
    %p76 = scmp.eq.s32.totalorder %s14, 7
    %p77 = por %p75, %p76
    %p78 = scmp.ne.s32.totalorder %s70, %s73
    %p79 = scmp.eq.s32.totalorder %s14, 0
    %p80 = por %p78, %p79
    %p81 = scmp.ne.s32.totalorder %s70, %s73
    %p82 = scmp.eq.s32.totalorder %s19, 7
    %p83 = por %p81, %p82
    %p84 = scmp.ne.s32.totalorder %s73, %s74
    %p85 = scmp.eq.s32.totalorder %s19, 0
    %p86 = por %p84, %p85
    %p87 = scmp.ne.s32.totalorder %s73, %s74
    %p88 = scmp.eq.s32.totalorder %s20, 7
    %p89 = por %p87, %p88
    %p91 = scmp.ne.s32.totalorder %s74, %s90
    %p92 = scmp.eq.s32.totalorder %s20, 0
    %p93 = por %p91, %p92
    %s95 = sadd.s32 %s94, 1
    %p98 = scmp.eq.s32.totalorder %s14, 7
    %p99 = scmp.ne.s32.totalorder %s94, %s96
    %p100 = scmp.eq.s32.totalorder %s14, 0
    %p101 = por %p99, %p100
    %p102 = scmp.ne.s32.totalorder %s94, %s96
    %p103 = scmp.eq.s32.totalorder %s19, 7
    %p104 = por %p102, %p103
    %p105 = scmp.ne.s32.totalorder %s96, %s97
    %p106 = scmp.eq.s32.totalorder %s19, 0
    %p107 = por %p105, %p106
    %p108 = scmp.ne.s32.totalorder %s96, %s97
    %p109 = scmp.eq.s32.totalorder %s20, 7
    %p110 = por %p108, %p109
    %p112 = scmp.ne.s32.totalorder %s97, %s111
    %p113 = scmp.eq.s32.totalorder %s20, 0
    %p114 = por %p112, %p113
    %s116 = sadd.s32 %s115, 1
    %p119 = scmp.eq.s32.totalorder %s14, 7
    %p120 = scmp.ne.s32.totalorder %s115, %s117
    %p121 = scmp.eq.s32.totalorder %s14, 0
    %p122 = por %p120, %p121
    %p123 = scmp.ne.s32.totalorder %s115, %s117
    %p124 = scmp.eq.s32.totalorder %s19, 7
    %p125 = por %p123, %p124
    %p126 = scmp.ne.s32.totalorder %s117, %s118
    %p127 = scmp.eq.s32.totalorder %s19, 0
    %p128 = por %p126, %p127
    %p129 = scmp.ne.s32.totalorder %s117, %s118
    %p130 = scmp.eq.s32.totalorder %s20, 7
    %p131 = por %p129, %p130
    %p133 = scmp.ne.s32.totalorder %s118, %s132
    %p134 = scmp.eq.s32.totalorder %s20, 0
    %p135 = por %p133, %p134
    %s137 = sadd.s32 %s136, 1
    %p140 = scmp.eq.s32.totalorder %s14, 7
    %p141 = scmp.ne.s32.totalorder %s136, %s138
    %p142 = scmp.eq.s32.totalorder %s14, 0
    %p143 = por %p141, %p142
    %p144 = scmp.ne.s32.totalorder %s136, %s138
    %p145 = scmp.eq.s32.totalorder %s19, 7
    %p146 = por %p144, %p145
    %p147 = scmp.ne.s32.totalorder %s138, %s139
    %p148 = scmp.eq.s32.totalorder %s19, 0
    %p149 = por %p147, %p148
    %p150 = scmp.ne.s32.totalorder %s138, %s139
    %p151 = scmp.eq.s32.totalorder %s20, 7
    %p152 = por %p150, %p151
    %p154 = scmp.ne.s32.totalorder %s139, %s153
    %p155 = scmp.eq.s32.totalorder %s20, 0
    %p156 = por %p154, %p155
    %s158 = sadd.s32 %s157, 1
    %p161 = scmp.eq.s32.totalorder %s14, 7
    %p162 = scmp.ne.s32.totalorder %s157, %s159
    %p163 = scmp.eq.s32.totalorder %s14, 0
    %p164 = por %p162, %p163
    %p165 = scmp.ne.s32.totalorder %s157, %s159
    %p166 = scmp.eq.s32.totalorder %s19, 7
    %p167 = por %p165, %p166
    %p168 = scmp.ne.s32.totalorder %s159, %s160
    %p169 = scmp.eq.s32.totalorder %s19, 0
    %p170 = por %p168, %p169
    %p171 = scmp.ne.s32.totalorder %s159, %s160
    %p172 = scmp.eq.s32.totalorder %s20, 7
    %p173 = por %p171, %p172
    %p175 = scmp.ne.s32.totalorder %s160, %s174
    %p176 = scmp.eq.s32.totalorder %s20, 0
    %p177 = por %p175, %p176
    %s179 = sadd.s32 %s178, 1
    %p182 = scmp.eq.s32.totalorder %s14, 7
    %p183 = scmp.ne.s32.totalorder %s178, %s180
    %p184 = scmp.eq.s32.totalorder %s14, 0
    %p185 = por %p183, %p184
    %p186 = scmp.ne.s32.totalorder %s178, %s180
    %p187 = scmp.eq.s32.totalorder %s19, 7
    %p188 = por %p186, %p187
    %p189 = scmp.ne.s32.totalorder %s180, %s181
    %p190 = scmp.eq.s32.totalorder %s19, 0
    %p191 = por %p189, %p190
    %p192 = scmp.ne.s32.totalorder %s180, %s181
    %p193 = scmp.eq.s32.totalorder %s20, 7
    %p194 = por %p192, %p193
    %p196 = scmp.ne.s32.totalorder %s181, %s195
    %p197 = scmp.eq.s32.totalorder %s20, 0
    %p198 = por %p196, %p197
    %s200 = sadd.s32 %s199, 1
    %p203 = scmp.eq.s32.totalorder %s14, 7
    %p204 = scmp.ne.s32.totalorder %s199, %s201
    %p205 = scmp.eq.s32.totalorder %s14, 0
    %p206 = por %p204, %p205
    %p207 = scmp.ne.s32.totalorder %s199, %s201
    %p208 = scmp.eq.s32.totalorder %s19, 7
    %p209 = por %p207, %p208
    %p210 = scmp.ne.s32.totalorder %s201, %s202
    %p211 = scmp.eq.s32.totalorder %s19, 0
    %p212 = por %p210, %p211
    %p213 = scmp.ne.s32.totalorder %s201, %s202
    %p214 = scmp.eq.s32.totalorder %s20, 7
    %p215 = por %p213, %p214
    %p217 = scmp.ne.s32.totalorder %s202, %s216
    %p218 = scmp.eq.s32.totalorder %s20, 0
    %p219 = por %p217, %p218
    %p220 = scmp.eq.s32.totalorder %s21, 3
    %s221 = scalar_select %p220, %s22, 0
    %p222 = scmp.eq.s32.totalorder %s33, 3
    %s223 = scalar_select %p222, %s29, 0
    %s224 = ssub.s32 %s221, %s223
    %p225 = scmp.eq.s32.totalorder %s224, 0
    %s227 = sadd.s32 %s226, 1
    %s228 = scalar_select %p225, %s226, %s227
    %p231 = pneg %p225
    %p232 = scmp.eq.s32.totalorder %s14, 7
    %p233 = por %p231, %p232
    %p234 = scmp.ne.s32.totalorder %s226, %s229
    %p235 = scmp.eq.s32.totalorder %s14, 0
    %p236 = por %p234, %p235
    %p237 = scmp.ne.s32.totalorder %s226, %s229
    %p238 = scmp.eq.s32.totalorder %s19, 7
    %p239 = por %p237, %p238
    %p240 = scmp.ne.s32.totalorder %s229, %s230
    %p241 = scmp.eq.s32.totalorder %s19, 0
    %p242 = por %p240, %p241
    %p243 = scmp.ne.s32.totalorder %s229, %s230
    %p244 = scmp.eq.s32.totalorder %s20, 7
    %p245 = por %p243, %p244
    %p247 = scmp.ne.s32.totalorder %s230, %s246
    %p248 = scmp.eq.s32.totalorder %s20, 0
    %p249 = por %p247, %p248
    %p250 = scmp.le.s32.totalorder 1, %s14
    %p251 = scmp.lt.s32.totalorder %s14, 9
    %p252 = pnand %p250, %p251
    %p253 = pneg %p252
    // Predicated region
    $region9: #{gnn_forward.1} parent=5 // pred_check
      _
    $region10: #{gnn_forward.1} parent=5 // pred_check_branch
      %255 = sbr.rel (%p252) target = $region12
    $region11: #{gnn_forward.1} parent=5 // pred_region
      %s256 = ssub.s32 %s14, 1
      // Predicated region
      $region13: #{gnn_forward.1} parent=11 // pred_check
        %p257 = pneg %p107
      $region14: #{gnn_forward.1} parent=11 // pred_check_branch
        %259 = sbr.rel (%p257) target = $region16
      $region15: #{gnn_forward.1} parent=11 // pred_region
        _
      $region16: #{gnn_forward.1} parent=11 // pred_fallthru
        _
      // Predicated region
      $region17: #{gnn_forward.1} parent=11 // pred_check
        %p260 = pneg %p128
      $region18: #{gnn_forward.1} parent=11 // pred_check_branch
        %262 = sbr.rel (%p260) target = $region20
      $region19: #{gnn_forward.1} parent=11 // pred_region
        _
      $region20: #{gnn_forward.1} parent=11 // pred_fallthru
        _
      // Predicated region
      $region21: #{gnn_forward.1} parent=11 // pred_check
        %p263 = pneg %p149
      $region22: #{gnn_forward.1} parent=11 // pred_check_branch
        %265 = sbr.rel (%p263) target = $region24
      $region23: #{gnn_forward.1} parent=11 // pred_region
        _
      $region24: #{gnn_forward.1} parent=11 // pred_fallthru
        _
      // Predicated region
      $region25: #{gnn_forward.1} parent=11 // pred_check
        %p266 = pneg %p170
      $region26: #{gnn_forward.1} parent=11 // pred_check_branch
        %268 = sbr.rel (%p266) target = $region28
      $region27: #{gnn_forward.1} parent=11 // pred_region
        _
      $region28: #{gnn_forward.1} parent=11 // pred_fallthru
        _
      // Predicated region
      $region29: #{gnn_forward.1} parent=11 // pred_check
        %p269 = pneg %p191
      $region30: #{gnn_forward.1} parent=11 // pred_check_branch
        %271 = sbr.rel (%p269) target = $region32
      $region31: #{gnn_forward.1} parent=11 // pred_region
        _
      $region32: #{gnn_forward.1} parent=11 // pred_fallthru
        _
      // Predicated region
      $region33: #{gnn_forward.1} parent=11 // pred_check
        %p272 = pneg %p212
      $region34: #{gnn_forward.1} parent=11 // pred_check_branch
        %274 = sbr.rel (%p272) target = $region36
      $region35: #{gnn_forward.1} parent=11 // pred_region
        _
      $region36: #{gnn_forward.1} parent=11 // pred_fallthru
        _
    $region12: #{gnn_forward.1} parent=5 // pred_fallthru
      _
    %p275 = scmp.lt.s32.totalorder %s14, 8
    // Predicated region
    $region37: #{gnn_forward.1} parent=5 // pred_check
      %p276 = pneg %p275
    $region38: #{gnn_forward.1} parent=5 // pred_check_branch
      %278 = sbr.rel (%p276) target = $region40
    $region39: #{gnn_forward.1} parent=5 // pred_region
      // Predicated region
      $region41: #{gnn_forward.1} parent=39 // pred_check
        %p279 = pneg %p50
      $region42: #{gnn_forward.1} parent=39 // pred_check_branch
        %281 = sbr.rel (%p279) target = $region44
      $region43: #{gnn_forward.1} parent=39 // pred_region
        %p282 = scmp.eq.s32.totalorder %s21, 0
        %s283 = scalar_select %p282, %s22, 0
        %s284 = smul.u32 16, %s283
        %p285 = scmp.lt.s32.totalorder %s284, 31
        %s286 = scalar_select %p285, %s284, 31
        %s287 = smul.addr %s286, 5
        %s288 = smul.addr %s287, 4
        %s289 = scalar_lea.vmem %s0, %s288
        %p290 = scmp.eq.s32.totalorder %s21, 0
        %s291 = scalar_select %p290, %s22, 0
        %s292 = smul.u32 16, %s291
      $region44: #{gnn_forward.1} parent=39 // pred_fallthru
        _
      // Predicated region
      $region45: #{gnn_forward.1} parent=39 // pred_check
        %p293 = pneg %p80
      $region46: #{gnn_forward.1} parent=39 // pred_check_branch
        %295 = sbr.rel (%p293) target = $region48
      $region47: #{gnn_forward.1} parent=39 // pred_region
        %p296 = scmp.eq.s32.totalorder %s21, 0
        %s297 = scalar_select %p296, 0, %s22
        %s298 = smul.u32 16, %s297
        %p299 = scmp.lt.s32.totalorder %s298, 31
        %s300 = scalar_select %p299, %s298, 31
        %s301 = smul.addr %s300, 2
        %s302 = smul.addr %s301, 4
        %s303 = scalar_lea.vmem %s1, %s302
        %p304 = scmp.eq.s32.totalorder %s21, 0
        %s305 = scalar_select %p304, 0, %s22
        %s306 = smul.u32 16, %s305
      $region48: #{gnn_forward.1} parent=39 // pred_fallthru
        _
    $region40: #{gnn_forward.1} parent=5 // pred_fallthru
      _
    %p307 = scmp.le.s32.totalorder 1, %s14
    %p308 = scmp.lt.s32.totalorder %s14, 9
    %p309 = pnand %p307, %p308
    %p310 = pneg %p309
    // Predicated region
    $region49: #{gnn_forward.1} parent=5 // pred_check
      _
    $region50: #{gnn_forward.1} parent=5 // pred_check_branch
      %312 = sbr.rel (%p309) target = $region52
    $region51: #{gnn_forward.1} parent=5 // pred_region
      %s313 = ssub.s32 %s14, 1
      %p314 = scmp.eq.s32.totalorder %s23, 0
      %s315 = scalar_select %p314, %s24, 0
      %s316 = smul.u32 16, %s315
      %p317 = scmp.lt.s32.totalorder %s316, 31
      %s318 = scalar_select %p317, %s316, 31
      %s319 = smul.addr %s318, 5
      %s320 = smul.addr %s319, 4
      %s321 = scalar_lea.vmem %s0, %s320
      %p322 = pneg %p56
      %p323 = pneg %p53
      %p324 = scmp.eq.s32.totalorder %s23, 0
      %s325 = scalar_select %p324, 0, %s24
      %s326 = smul.u32 16, %s325
      %p327 = scmp.lt.s32.totalorder %s326, 31
      %s328 = scalar_select %p327, %s326, 31
      %s329 = smul.addr %s328, 2
      %s330 = smul.addr %s329, 4
      %s331 = scalar_lea.vmem %s1, %s330
      %p332 = pneg %p86
      %p333 = pneg %p83
      %p334 = pneg %p107
      %p335 = pneg %p104
      %p336 = pneg %p128
      %p337 = pneg %p125
      %p338 = pneg %p149
      %p339 = pneg %p146
      %p340 = pneg %p170
      %p341 = pneg %p167
      %p342 = pneg %p191
      %p343 = pneg %p188
      %p344 = pneg %p212
      %p345 = pneg %p209
      %p346 = pneg %p242
      %p347 = pneg %p239
      %p348 = scmp.eq.s32.totalorder %s23, 3
      %s349 = scalar_select %p348, %s24, 0
      %s350 = smul.u32 16, %s349
      %p351 = scmp.lt.s32.totalorder %s350, 31
      %s352 = scalar_select %p351, %s350, 31
      %s353 = smul.addr %s352, 5
      %s354 = smul.addr %s353, 8
      %s355 = scalar_lea.vmem %s8, %s354
      %p356 = scmp.eq.s32.totalorder %s23, 0
      %s357 = scalar_select %p356, %s24, 0
      %s358 = smul.u32 16, %s357
      %p359 = scmp.lt.s32.totalorder %s358, 31
      %s360 = scalar_select %p359, %s358, 31
      %s361 = smul.addr %s360, 5
      %s362 = smul.addr %s361, 4
      %s363 = scalar_lea.vmem %s0, %s362
      %p364 = scmp.eq.s32.totalorder %s23, 0
      %s365 = scalar_select %p364, %s24, 0
      %s366 = smul.u32 16, %s365
      %p367 = scmp.eq.s32.totalorder %s23, 0
      %s368 = scalar_select %p367, 0, %s24
      %s369 = smul.u32 16, %s368
      %p370 = scmp.lt.s32.totalorder %s369, 31
      %s371 = scalar_select %p370, %s369, 31
      %s372 = smul.addr %s371, 2
      %s373 = smul.addr %s372, 4
      %s374 = scalar_lea.vmem %s1, %s373
      %p375 = scmp.eq.s32.totalorder %s23, 0
      %s376 = scalar_select %p375, 0, %s24
      %s377 = smul.u32 16, %s376
      %p378 = scmp.eq.s32.totalorder %s23, 3
      %s379 = scalar_select %p378, %s24, 0
      %s380 = smul.u32 16, %s379
      %p381 = scmp.lt.s32.totalorder %s380, 31
      %s382 = scalar_select %p381, %s380, 31
      %s383 = smul.addr %s382, 5
      %s384 = smul.addr %s383, 8
      %s385 = scalar_lea.vmem %s8, %s384
      %p386 = scmp.eq.s32.totalorder %s23, 3
      %s387 = scalar_select %p386, %s24, 0
      %s388 = smul.u32 16, %s387
      %s390 = smul.u32 %s24, 128
      %p391 = scmp.eq.s32.totalorder %s23, 0
      // Predicated region
      $region53: #{gnn_forward.1} parent=51 // pred_check
        %p392 = pneg %p391
      $region54: #{gnn_forward.1} parent=51 // pred_check_branch
        %394 = sbr.rel (%p392) target = $region56
      $region55: #{gnn_forward.1} parent=51 // pred_region
        %v395 = vld [vmem:[%s363] sm:$0xff]
        %v396 = vld [vmem:[%s363 + $0x8] sm:$0xff]
        %v397 = vld [vmem:[%s363 + $0x10] sm:$0xf]
        %v398 = vld [vmem:[%s363 + $0x14] sm:$0xff]
        %v399 = vld [vmem:[%s363 + $0x1c] sm:$0xff]
        %v400 = vld [vmem:[%s363 + $0x24] sm:$0xf]
        %v401 = vld [vmem:[%s363 + $0x28] sm:$0xff]
        %v402 = vld [vmem:[%s363 + $0x30] sm:$0xff]
        %v403 = vld [vmem:[%s363 + $0x38] sm:$0xf]
        %v404 = vld [vmem:[%s363 + $0x3c] sm:$0xff]
        %v405 = vld [vmem:[%s363 + $0x44] sm:$0xff]
        %v406 = vld [vmem:[%s363 + $0x4c] sm:$0xf]
        %v407 = vld [vmem:[%s363 + $0x50] sm:$0xff]
        %v408 = vld [vmem:[%s363 + $0x58] sm:$0xff]
        %v409 = vld [vmem:[%s363 + $0x60] sm:$0xf]
        %v410 = vld [vmem:[%s363 + $0x64] sm:$0xff]
        %v411 = vld [vmem:[%s363 + $0x6c] sm:$0xff]
        %v412 = vld [vmem:[%s363 + $0x74] sm:$0xf]
        %v413 = vld [vmem:[%s363 + $0x78] sm:$0xff]
        %v414 = vld [vmem:[%s363 + $0x80] sm:$0xff]
        %v415 = vld [vmem:[%s363 + $0x88] sm:$0xf]
        %v416 = vld [vmem:[%s363 + $0x8c] sm:$0xff]
        %v417 = vld [vmem:[%s363 + $0x94] sm:$0xff]
        %v418 = vld [vmem:[%s363 + $0x9c] sm:$0xf]
        %v419 = vld [vmem:[%s363 + $0xa0] sm:$0xff]
        %v420 = vld [vmem:[%s363 + $0xa8] sm:$0xff]
        %v421 = vld [vmem:[%s363 + $0xb0] sm:$0xf]
        %v422 = vld [vmem:[%s363 + $0xb4] sm:$0xff]
        %v423 = vld [vmem:[%s363 + $0xbc] sm:$0xff]
        %v424 = vld [vmem:[%s363 + $0xc4] sm:$0xf]
        %v425 = vld [vmem:[%s363 + $0xc8] sm:$0xff]
        %v426 = vld [vmem:[%s363 + $0xd0] sm:$0xff]
        %v427 = vld [vmem:[%s363 + $0xd8] sm:$0xf]
        %v428 = vld [vmem:[%s363 + $0xdc] sm:$0xff]
        %v429 = vld [vmem:[%s363 + $0xe4] sm:$0xff]
        %v430 = vld [vmem:[%s363 + $0xec] sm:$0xf]
        %v431 = vld [vmem:[%s363 + $0xf0] sm:$0xff]
        %v432 = vld [vmem:[%s363 + $0xf8] sm:$0xff]
        %v433 = vld [vmem:[%s363 + $0x100] sm:$0xf]
        %v434 = vld [vmem:[%s363 + $0x104] sm:$0xff]
        %v435 = vld [vmem:[%s363 + $0x10c] sm:$0xff]
        %v436 = vld [vmem:[%s363 + $0x114] sm:$0xf]
        %v437 = vld [vmem:[%s363 + $0x118] sm:$0xff]
        %v438 = vld [vmem:[%s363 + $0x120] sm:$0xff]
        %v439 = vld [vmem:[%s363 + $0x128] sm:$0xf]
        %v440 = vld [vmem:[%s363 + $0x12c] sm:$0xff]
        %v441 = vld [vmem:[%s363 + $0x134] sm:$0xff]
        %v442 = vld [vmem:[%s363 + $0x13c] sm:$0xf]
        %v443 = vld [vmem:[%s2] sm:$0xf]
        %v444 = vld [vmem:[%s2 + $0x4] sm:$0xf]
        %v445 = vld [vmem:[%s2 + $0x8] sm:$0xf]
        %v446 = vld [vmem:[%s2 + $0xc] sm:$0xf]
        %v447 = vld [vmem:[%s2 + $0x10] sm:$0xf]
        %v448 = vld [vmem:[%s2 + $0x14] sm:$0xf]
        %v449 = vld [vmem:[%s2 + $0x18] sm:$0xf]
        %v450 = vld [vmem:[%s2 + $0x1c] sm:$0xf]
        %v451 = vld [vmem:[%s2 + $0x20] sm:$0xf]
        %v452 = vld [vmem:[%s2 + $0x24] sm:$0xf]
        %v453 = vld [vmem:[%s2 + $0x28] sm:$0xf]
        %v454 = vld [vmem:[%s2 + $0x2c] sm:$0xf]
        %v455 = vld [vmem:[%s2 + $0x30] sm:$0xf]
        %v456 = vld [vmem:[%s2 + $0x34] sm:$0xf]
        %v457 = vld [vmem:[%s2 + $0x38] sm:$0xf]
        %v458 = vld [vmem:[%s2 + $0x3c] sm:$0xf]
        %v459 = vld [vmem:[%s2 + $0x40] sm:$0xf]
        %v460 = vld [vmem:[%s2 + $0x44] sm:$0xf]
        %v461 = vld [vmem:[%s2 + $0x48] sm:$0xf]
        %v462 = vld [vmem:[%s2 + $0x4c] sm:$0xf]
        %v463 = vld [vmem:[%s2 + $0x50] sm:$0xf]
        %v464 = vld [vmem:[%s2 + $0x54] sm:$0xf]
        %v465 = vld [vmem:[%s2 + $0x58] sm:$0xf]
        %v466 = vld [vmem:[%s2 + $0x5c] sm:$0xf]
        %v467 = vld [vmem:[%s2 + $0x60] sm:$0xf]
        %v468 = vld [vmem:[%s2 + $0x64] sm:$0xf]
        %v469 = vld [vmem:[%s2 + $0x68] sm:$0xf]
        %v470 = vld [vmem:[%s2 + $0x6c] sm:$0xf]
        %v471 = vld [vmem:[%s2 + $0x70] sm:$0xf]
        %v472 = vld [vmem:[%s2 + $0x74] sm:$0xf]
        %v473 = vld [vmem:[%s2 + $0x78] sm:$0xf]
        %v474 = vld [vmem:[%s2 + $0x7c] sm:$0xf]
        %v475 = vld [vmem:[%s2 + $0x80] sm:$0xf]
        %v476 = vld [vmem:[%s2 + $0x84] sm:$0xf]
        %v477 = vld [vmem:[%s2 + $0x88] sm:$0xf]
        %v478 = vld [vmem:[%s2 + $0x8c] sm:$0xf]
        %v479 = vld [vmem:[%s2 + $0x90] sm:$0xf]
        %v480 = vld [vmem:[%s2 + $0x94] sm:$0xf]
        %v481 = vld [vmem:[%s2 + $0x98] sm:$0xf]
        %v482 = vld [vmem:[%s2 + $0x9c] sm:$0xf]
        %v483 = vld [vmem:[%s2 + $0xa0] sm:$0xf]
        %v484 = vld [vmem:[%s2 + $0xa4] sm:$0xf]
        %v485 = vld [vmem:[%s2 + $0xa8] sm:$0xf]
        %v486 = vld [vmem:[%s2 + $0xac] sm:$0xf]
        %v487 = vld [vmem:[%s2 + $0xb0] sm:$0xf]
        %v488 = vld [vmem:[%s2 + $0xb4] sm:$0xf]
        %v489 = vld [vmem:[%s2 + $0xb8] sm:$0xf]
        %v490 = vld [vmem:[%s2 + $0xbc] sm:$0xf]
        %v491 = vld [vmem:[%s2 + $0xc0] sm:$0xf]
        %v492 = vld [vmem:[%s2 + $0xc4] sm:$0xf]
        %v493 = vld [vmem:[%s2 + $0xc8] sm:$0xf]
        %v494 = vld [vmem:[%s2 + $0xcc] sm:$0xf]
        %v495 = vld [vmem:[%s2 + $0xd0] sm:$0xf]
        %v496 = vld [vmem:[%s2 + $0xd4] sm:$0xf]
        %v497 = vld [vmem:[%s2 + $0xd8] sm:$0xf]
        %v498 = vld [vmem:[%s2 + $0xdc] sm:$0xf]
        %v499 = vld [vmem:[%s2 + $0xe0] sm:$0xf]
        %v500 = vld [vmem:[%s2 + $0xe4] sm:$0xf]
        %v501 = vld [vmem:[%s2 + $0xe8] sm:$0xf]
        %v502 = vld [vmem:[%s2 + $0xec] sm:$0xf]
        %v503 = vld [vmem:[%s2 + $0xf0] sm:$0xf]
        %v504 = vld [vmem:[%s2 + $0xf4] sm:$0xf]
        %v505 = vld [vmem:[%s2 + $0xf8] sm:$0xf]
        %v506 = vld [vmem:[%s2 + $0xfc] sm:$0xf]
        %v507 = vld [vmem:[%s2 + $0x100] sm:$0xf]
        %v508 = vld [vmem:[%s2 + $0x104] sm:$0xf]
        %v509 = vld [vmem:[%s2 + $0x108] sm:$0xf]
        %v510 = vld [vmem:[%s2 + $0x10c] sm:$0xf]
        %v511 = vld [vmem:[%s2 + $0x110] sm:$0xf]
        %v512 = vld [vmem:[%s2 + $0x114] sm:$0xf]
        %v513 = vld [vmem:[%s2 + $0x118] sm:$0xf]
        %v514 = vld [vmem:[%s2 + $0x11c] sm:$0xf]
        %v515 = vld [vmem:[%s2 + $0x120] sm:$0xf]
        %v516 = vld [vmem:[%s2 + $0x124] sm:$0xf]
        %v517 = vld [vmem:[%s2 + $0x128] sm:$0xf]
        %v518 = vld [vmem:[%s2 + $0x12c] sm:$0xf]
        %v519 = vld [vmem:[%s2 + $0x130] sm:$0xf]
        %v520 = vld [vmem:[%s2 + $0x134] sm:$0xf]
        %v521 = vld [vmem:[%s2 + $0x138] sm:$0xf]
        %v522 = vld [vmem:[%s2 + $0x13c] sm:$0xf]
        %v571 = vunpack.c.l.b16 %v395
        %v572 = vunpack.c.h.b16 %v395
        %v573 = vunpack.c.l.b16 %v396
        %v574 = vunpack.c.h.b16 %v396
        %v575 = vunpack.c.l.b16 %v397
        %v576 = vunpack.c.l.b16 %v398
        %v577 = vunpack.c.h.b16 %v398
        %v578 = vunpack.c.l.b16 %v399
        %v579 = vunpack.c.h.b16 %v399
        %v580 = vunpack.c.l.b16 %v400
        %v581 = vunpack.c.l.b16 %v401
        %v582 = vunpack.c.h.b16 %v401
        %v583 = vunpack.c.l.b16 %v402
        %v584 = vunpack.c.h.b16 %v402
        %v585 = vunpack.c.l.b16 %v403
        %v586 = vunpack.c.l.b16 %v404
        %v587 = vunpack.c.h.b16 %v404
        %v588 = vunpack.c.l.b16 %v405
        %v589 = vunpack.c.h.b16 %v405
        %v590 = vunpack.c.l.b16 %v406
        %v591 = vunpack.c.l.b16 %v407
        %v592 = vunpack.c.h.b16 %v407
        %v593 = vunpack.c.l.b16 %v408
        %v594 = vunpack.c.h.b16 %v408
        %v595 = vunpack.c.l.b16 %v409
        %v596 = vunpack.c.l.b16 %v410
        %v597 = vunpack.c.h.b16 %v410
        %v598 = vunpack.c.l.b16 %v411
        %v599 = vunpack.c.h.b16 %v411
        %v600 = vunpack.c.l.b16 %v412
        %v601 = vunpack.c.l.b16 %v413
        %v602 = vunpack.c.h.b16 %v413
        %v603 = vunpack.c.l.b16 %v414
        %v604 = vunpack.c.h.b16 %v414
        %v605 = vunpack.c.l.b16 %v415
        %v606 = vunpack.c.l.b16 %v416
        %v607 = vunpack.c.h.b16 %v416
        %v608 = vunpack.c.l.b16 %v417
        %v609 = vunpack.c.h.b16 %v417
        %v610 = vunpack.c.l.b16 %v418
        %v611 = vunpack.c.l.b16 %v419
        %v612 = vunpack.c.h.b16 %v419
        %v613 = vunpack.c.l.b16 %v420
        %v614 = vunpack.c.h.b16 %v420
        %v615 = vunpack.c.l.b16 %v421
        %v616 = vunpack.c.l.b16 %v422
        %v617 = vunpack.c.h.b16 %v422
        %v618 = vunpack.c.l.b16 %v423
        %v619 = vunpack.c.h.b16 %v423
        %v620 = vunpack.c.l.b16 %v424
        %v621 = vunpack.c.l.b16 %v425
        %v622 = vunpack.c.h.b16 %v425
        %v623 = vunpack.c.l.b16 %v426
        %v624 = vunpack.c.h.b16 %v426
        %v625 = vunpack.c.l.b16 %v427
        %v626 = vunpack.c.l.b16 %v428
        %v627 = vunpack.c.h.b16 %v428
        %v628 = vunpack.c.l.b16 %v429
        %v629 = vunpack.c.h.b16 %v429
        %v630 = vunpack.c.l.b16 %v430
        %v631 = vunpack.c.l.b16 %v431
        %v632 = vunpack.c.h.b16 %v431
        %v633 = vunpack.c.l.b16 %v432
        %v634 = vunpack.c.h.b16 %v432
        %v635 = vunpack.c.l.b16 %v433
        %v636 = vunpack.c.l.b16 %v434
        %v637 = vunpack.c.h.b16 %v434
        %v638 = vunpack.c.l.b16 %v435
        %v639 = vunpack.c.h.b16 %v435
        %v640 = vunpack.c.l.b16 %v436
        %v641 = vunpack.c.l.b16 %v437
        %v642 = vunpack.c.h.b16 %v437
        %v643 = vunpack.c.l.b16 %v438
        %v644 = vunpack.c.h.b16 %v438
        %v645 = vunpack.c.l.b16 %v439
        %v646 = vunpack.c.l.b16 %v440
        %v647 = vunpack.c.h.b16 %v440
        %v648 = vunpack.c.l.b16 %v441
        %v649 = vunpack.c.h.b16 %v441
        %v650 = vunpack.c.l.b16 %v442
        %v651 = vpack.c.b16 %v576, %v571
        %v652 = vpack.c.b16 %v577, %v572
        %v653 = vpack.c.b16 %v578, %v573
        %v654 = vpack.c.b16 %v579, %v574
        %v655 = vpack.c.b16 %v580, %v575
        %v656 = vpack.c.b16 %v586, %v581
        %v657 = vpack.c.b16 %v587, %v582
        %v658 = vpack.c.b16 %v588, %v583
        %v659 = vpack.c.b16 %v589, %v584
        %v660 = vpack.c.b16 %v590, %v585
        %v661 = vpack.c.b16 %v596, %v591
        %v662 = vpack.c.b16 %v597, %v592
        %v663 = vpack.c.b16 %v598, %v593
        %v664 = vpack.c.b16 %v599, %v594
        %v665 = vpack.c.b16 %v600, %v595
        %v666 = vpack.c.b16 %v606, %v601
        %v667 = vpack.c.b16 %v607, %v602
        %v668 = vpack.c.b16 %v608, %v603
        %v669 = vpack.c.b16 %v609, %v604
        %v670 = vpack.c.b16 %v610, %v605
        %v671 = vpack.c.b16 %v616, %v611
        %v672 = vpack.c.b16 %v617, %v612
        %v673 = vpack.c.b16 %v618, %v613
        %v674 = vpack.c.b16 %v619, %v614
        %v675 = vpack.c.b16 %v620, %v615
        %v676 = vpack.c.b16 %v626, %v621
        %v677 = vpack.c.b16 %v627, %v622
        %v678 = vpack.c.b16 %v628, %v623
        %v679 = vpack.c.b16 %v629, %v624
        %v680 = vpack.c.b16 %v630, %v625
        %v681 = vpack.c.b16 %v636, %v631
        %v682 = vpack.c.b16 %v637, %v632
        %v683 = vpack.c.b16 %v638, %v633
        %v684 = vpack.c.b16 %v639, %v634
        %v685 = vpack.c.b16 %v640, %v635
        %v686 = vpack.c.b16 %v646, %v641
        %v687 = vpack.c.b16 %v647, %v642
        %v688 = vpack.c.b16 %v648, %v643
        %v689 = vpack.c.b16 %v649, %v644
        %v690 = vpack.c.b16 %v650, %v645
        %v811 = vunpack.c.l.b16 %v443
        %v812 = vunpack.c.l.b16 %v444
        %v813 = vunpack.c.l.b16 %v445
        %v814 = vunpack.c.l.b16 %v446
        %v815 = vunpack.c.l.b16 %v447
        %v816 = vunpack.c.l.b16 %v448
        %v817 = vunpack.c.l.b16 %v449
        %v818 = vunpack.c.l.b16 %v450
        %v819 = vunpack.c.l.b16 %v451
        %v820 = vunpack.c.l.b16 %v452
        %v821 = vunpack.c.l.b16 %v453
        %v822 = vunpack.c.l.b16 %v454
        %v823 = vunpack.c.l.b16 %v455
        %v824 = vunpack.c.l.b16 %v456
        %v825 = vunpack.c.l.b16 %v457
        %v826 = vunpack.c.l.b16 %v458
        %v827 = vunpack.c.l.b16 %v459
        %v828 = vunpack.c.l.b16 %v460
        %v829 = vunpack.c.l.b16 %v461
        %v830 = vunpack.c.l.b16 %v462
        %v831 = vunpack.c.l.b16 %v463
        %v832 = vunpack.c.l.b16 %v464
        %v833 = vunpack.c.l.b16 %v465
        %v834 = vunpack.c.l.b16 %v466
        %v835 = vunpack.c.l.b16 %v467
        %v836 = vunpack.c.l.b16 %v468
        %v837 = vunpack.c.l.b16 %v469
        %v838 = vunpack.c.l.b16 %v470
        %v839 = vunpack.c.l.b16 %v471
        %v840 = vunpack.c.l.b16 %v472
        %v841 = vunpack.c.l.b16 %v473
        %v842 = vunpack.c.l.b16 %v474
        %v843 = vunpack.c.l.b16 %v475
        %v844 = vunpack.c.l.b16 %v476
        %v845 = vunpack.c.l.b16 %v477
        %v846 = vunpack.c.l.b16 %v478
        %v847 = vunpack.c.l.b16 %v479
        %v848 = vunpack.c.l.b16 %v480
        %v849 = vunpack.c.l.b16 %v481
        %v850 = vunpack.c.l.b16 %v482
        %v851 = vunpack.c.l.b16 %v483
        %v852 = vunpack.c.l.b16 %v484
        %v853 = vunpack.c.l.b16 %v485
        %v854 = vunpack.c.l.b16 %v486
        %v855 = vunpack.c.l.b16 %v487
        %v856 = vunpack.c.l.b16 %v488
        %v857 = vunpack.c.l.b16 %v489
        %v858 = vunpack.c.l.b16 %v490
        %v859 = vunpack.c.l.b16 %v491
        %v860 = vunpack.c.l.b16 %v492
        %v861 = vunpack.c.l.b16 %v493
        %v862 = vunpack.c.l.b16 %v494
        %v863 = vunpack.c.l.b16 %v495
        %v864 = vunpack.c.l.b16 %v496
        %v865 = vunpack.c.l.b16 %v497
        %v866 = vunpack.c.l.b16 %v498
        %v867 = vunpack.c.l.b16 %v499
        %v868 = vunpack.c.l.b16 %v500
        %v869 = vunpack.c.l.b16 %v501
        %v870 = vunpack.c.l.b16 %v502
        %v871 = vunpack.c.l.b16 %v503
        %v872 = vunpack.c.l.b16 %v504
        %v873 = vunpack.c.l.b16 %v505
        %v874 = vunpack.c.l.b16 %v506
        %v875 = vunpack.c.l.b16 %v507
        %v876 = vunpack.c.l.b16 %v508
        %v877 = vunpack.c.l.b16 %v509
        %v878 = vunpack.c.l.b16 %v510
        %v879 = vunpack.c.l.b16 %v511
        %v880 = vunpack.c.l.b16 %v512
        %v881 = vunpack.c.l.b16 %v513
        %v882 = vunpack.c.l.b16 %v514
        %v883 = vunpack.c.l.b16 %v515
        %v884 = vunpack.c.l.b16 %v516
        %v885 = vunpack.c.l.b16 %v517
        %v886 = vunpack.c.l.b16 %v518
        %v887 = vunpack.c.l.b16 %v519
        %v888 = vunpack.c.l.b16 %v520
        %v889 = vunpack.c.l.b16 %v521
        %v890 = vunpack.c.l.b16 %v522
        %v891 = vpack.c.b16 %v812, %v811
        %v892 = vpack.c.b16 %v814, %v813
        %v893 = vpack.c.b16 %v816, %v815
        %v894 = vpack.c.b16 %v818, %v817
        %v895 = vpack.c.b16 %v820, %v819
        %v896 = vpack.c.b16 %v822, %v821
        %v897 = vpack.c.b16 %v824, %v823
        %v898 = vpack.c.b16 %v826, %v825
        %v899 = vpack.c.b16 %v828, %v827
        %v900 = vpack.c.b16 %v830, %v829
        %v901 = vpack.c.b16 %v832, %v831
        %v902 = vpack.c.b16 %v834, %v833
        %v903 = vpack.c.b16 %v836, %v835
        %v904 = vpack.c.b16 %v838, %v837
        %v905 = vpack.c.b16 %v840, %v839
        %v906 = vpack.c.b16 %v842, %v841
        %v907 = vpack.c.b16 %v844, %v843
        %v908 = vpack.c.b16 %v846, %v845
        %v909 = vpack.c.b16 %v848, %v847
        %v910 = vpack.c.b16 %v850, %v849
        %v911 = vpack.c.b16 %v852, %v851
        %v912 = vpack.c.b16 %v854, %v853
        %v913 = vpack.c.b16 %v856, %v855
        %v914 = vpack.c.b16 %v858, %v857
        %v915 = vpack.c.b16 %v860, %v859
        %v916 = vpack.c.b16 %v862, %v861
        %v917 = vpack.c.b16 %v864, %v863
        %v918 = vpack.c.b16 %v866, %v865
        %v919 = vpack.c.b16 %v868, %v867
        %v920 = vpack.c.b16 %v870, %v869
        %v921 = vpack.c.b16 %v872, %v871
        %v922 = vpack.c.b16 %v874, %v873
        %v923 = vpack.c.b16 %v876, %v875
        %v924 = vpack.c.b16 %v878, %v877
        %v925 = vpack.c.b16 %v880, %v879
        %v926 = vpack.c.b16 %v882, %v881
        %v927 = vpack.c.b16 %v884, %v883
        %v928 = vpack.c.b16 %v886, %v885
        %v929 = vpack.c.b16 %v888, %v887
        %v930 = vpack.c.b16 %v890, %v889
        %971 = vmatpush.bf16.msra.mxu0 %v898
        %972 = vmatpush.bf16.msra.mxu0 %v897
        %973 = vmatpush.bf16.msra.mxu0 %v896
        %974 = vmatpush.bf16.msra.mxu0 %v895
        %975 = vmatpush.bf16.msra.mxu0 %v894
        %976 = vmatpush.bf16.msra.mxu0 %v893
        %977 = vmatpush.bf16.msra.mxu0 %v892
        %978 = vmatpush.bf16.msra.mxu0 %v891
        %979 = vmatmul.bf16.gmra.mxu0 %v651
        %v980 = vpop.f32.mrf.mxu0
        %v981 = vadd.f32 0.0, %v980
        %v982 = vpop.f32.mrf.mxu0
        %v983 = vadd.f32 0.0, %v982
        %984 = vmatmul.bf16.gmra.mxu0 %v656
        %v985 = vpop.f32.mrf.mxu0
        %v986 = vadd.f32 0.0, %v985
        %v987 = vpop.f32.mrf.mxu0
        %v988 = vadd.f32 0.0, %v987
        %989 = vmatmul.bf16.gmra.mxu0 %v661
        %v990 = vpop.f32.mrf.mxu0
        %v991 = vadd.f32 0.0, %v990
        %v992 = vpop.f32.mrf.mxu0
        %v993 = vadd.f32 0.0, %v992
        %994 = vmatmul.bf16.gmra.mxu0 %v666
        %v995 = vpop.f32.mrf.mxu0
        %v996 = vadd.f32 0.0, %v995
        %v997 = vpop.f32.mrf.mxu0
        %v998 = vadd.f32 0.0, %v997
        %999 = vmatmul.bf16.gmra.mxu0 %v671
        %v1000 = vpop.f32.mrf.mxu0
        %v1001 = vadd.f32 0.0, %v1000
        %v1002 = vpop.f32.mrf.mxu0
        %v1003 = vadd.f32 0.0, %v1002
        %1004 = vmatmul.bf16.gmra.mxu0 %v676
        %v1005 = vpop.f32.mrf.mxu0
        %v1006 = vadd.f32 0.0, %v1005
        %v1007 = vpop.f32.mrf.mxu0
        %v1008 = vadd.f32 0.0, %v1007
        %1009 = vmatmul.bf16.gmra.mxu0 %v681
        %v1010 = vpop.f32.mrf.mxu0
        %v1011 = vadd.f32 0.0, %v1010
        %v1012 = vpop.f32.mrf.mxu0
        %v1013 = vadd.f32 0.0, %v1012
        %1014 = vmatmul.bf16.gmra.mxu0 %v686
        %v1015 = vpop.f32.mrf.mxu0
        %v1016 = vadd.f32 0.0, %v1015
        %v1017 = vpop.f32.mrf.mxu0
        %v1018 = vadd.f32 0.0, %v1017
        %1019 = vdwg.mxu0
        %1020 = vmatpush.bf16.msra.mxu0 %v906
        %1021 = vmatpush.bf16.msra.mxu0 %v905
        %1022 = vmatpush.bf16.msra.mxu0 %v904
        %1023 = vmatpush.bf16.msra.mxu0 %v903
        %1024 = vmatpush.bf16.msra.mxu0 %v902
        %1025 = vmatpush.bf16.msra.mxu0 %v901
        %1026 = vmatpush.bf16.msra.mxu0 %v900
        %1027 = vmatpush.bf16.msra.mxu0 %v899
        %1028 = vmatmul.bf16.gmra.mxu0 %v652
        %v1029 = vpop.f32.mrf.mxu0
        %v1030 = vadd.f32 %v981, %v1029
        %v1031 = vpop.f32.mrf.mxu0
        %v1032 = vadd.f32 %v983, %v1031
        %1033 = vmatmul.bf16.gmra.mxu0 %v657
        %v1034 = vpop.f32.mrf.mxu0
        %v1035 = vadd.f32 %v986, %v1034
        %v1036 = vpop.f32.mrf.mxu0
        %v1037 = vadd.f32 %v988, %v1036
        %1038 = vmatmul.bf16.gmra.mxu0 %v662
        %v1039 = vpop.f32.mrf.mxu0
        %v1040 = vadd.f32 %v991, %v1039
        %v1041 = vpop.f32.mrf.mxu0
        %v1042 = vadd.f32 %v993, %v1041
        %1043 = vmatmul.bf16.gmra.mxu0 %v667
        %v1044 = vpop.f32.mrf.mxu0
        %v1045 = vadd.f32 %v996, %v1044
        %v1046 = vpop.f32.mrf.mxu0
        %v1047 = vadd.f32 %v998, %v1046
        %1048 = vmatmul.bf16.gmra.mxu0 %v672
        %v1049 = vpop.f32.mrf.mxu0
        %v1050 = vadd.f32 %v1001, %v1049
        %v1051 = vpop.f32.mrf.mxu0
        %v1052 = vadd.f32 %v1003, %v1051
        %1053 = vmatmul.bf16.gmra.mxu0 %v677
        %v1054 = vpop.f32.mrf.mxu0
        %v1055 = vadd.f32 %v1006, %v1054
        %v1056 = vpop.f32.mrf.mxu0
        %v1057 = vadd.f32 %v1008, %v1056
        %1058 = vmatmul.bf16.gmra.mxu0 %v682
        %v1059 = vpop.f32.mrf.mxu0
        %v1060 = vadd.f32 %v1011, %v1059
        %v1061 = vpop.f32.mrf.mxu0
        %v1062 = vadd.f32 %v1013, %v1061
        %1063 = vmatmul.bf16.gmra.mxu0 %v687
        %v1064 = vpop.f32.mrf.mxu0
        %v1065 = vadd.f32 %v1016, %v1064
        %v1066 = vpop.f32.mrf.mxu0
        %v1067 = vadd.f32 %v1018, %v1066
        %1068 = vdwg.mxu0
        %1069 = vmatpush.bf16.msra.mxu0 %v914
        %1070 = vmatpush.bf16.msra.mxu0 %v913
        %1071 = vmatpush.bf16.msra.mxu0 %v912
        %1072 = vmatpush.bf16.msra.mxu0 %v911
        %1073 = vmatpush.bf16.msra.mxu0 %v910
        %1074 = vmatpush.bf16.msra.mxu0 %v909
        %1075 = vmatpush.bf16.msra.mxu0 %v908
        %1076 = vmatpush.bf16.msra.mxu0 %v907
        %1077 = vmatmul.bf16.gmra.mxu0 %v653
        %v1078 = vpop.f32.mrf.mxu0
        %v1079 = vadd.f32 %v1030, %v1078
        %v1080 = vpop.f32.mrf.mxu0
        %v1081 = vadd.f32 %v1032, %v1080
        %1082 = vmatmul.bf16.gmra.mxu0 %v658
        %v1083 = vpop.f32.mrf.mxu0
        %v1084 = vadd.f32 %v1035, %v1083
        %v1085 = vpop.f32.mrf.mxu0
        %v1086 = vadd.f32 %v1037, %v1085
        %1087 = vmatmul.bf16.gmra.mxu0 %v663
        %v1088 = vpop.f32.mrf.mxu0
        %v1089 = vadd.f32 %v1040, %v1088
        %v1090 = vpop.f32.mrf.mxu0
        %v1091 = vadd.f32 %v1042, %v1090
        %1092 = vmatmul.bf16.gmra.mxu0 %v668
        %v1093 = vpop.f32.mrf.mxu0
        %v1094 = vadd.f32 %v1045, %v1093
        %v1095 = vpop.f32.mrf.mxu0
        %v1096 = vadd.f32 %v1047, %v1095
        %1097 = vmatmul.bf16.gmra.mxu0 %v673
        %v1098 = vpop.f32.mrf.mxu0
        %v1099 = vadd.f32 %v1050, %v1098
        %v1100 = vpop.f32.mrf.mxu0
        %v1101 = vadd.f32 %v1052, %v1100
        %1102 = vmatmul.bf16.gmra.mxu0 %v678
        %v1103 = vpop.f32.mrf.mxu0
        %v1104 = vadd.f32 %v1055, %v1103
        %v1105 = vpop.f32.mrf.mxu0
        %v1106 = vadd.f32 %v1057, %v1105
        %1107 = vmatmul.bf16.gmra.mxu0 %v683
        %v1108 = vpop.f32.mrf.mxu0
        %v1109 = vadd.f32 %v1060, %v1108
        %v1110 = vpop.f32.mrf.mxu0
        %v1111 = vadd.f32 %v1062, %v1110
        %1112 = vmatmul.bf16.gmra.mxu0 %v688
        %v1113 = vpop.f32.mrf.mxu0
        %v1114 = vadd.f32 %v1065, %v1113
        %v1115 = vpop.f32.mrf.mxu0
        %v1116 = vadd.f32 %v1067, %v1115
        %1117 = vdwg.mxu0
        %1118 = vmatpush.bf16.msra.mxu0 %v922
        %1119 = vmatpush.bf16.msra.mxu0 %v921
        %1120 = vmatpush.bf16.msra.mxu0 %v920
        %1121 = vmatpush.bf16.msra.mxu0 %v919
        %1122 = vmatpush.bf16.msra.mxu0 %v918
        %1123 = vmatpush.bf16.msra.mxu0 %v917
        %1124 = vmatpush.bf16.msra.mxu0 %v916
        %1125 = vmatpush.bf16.msra.mxu0 %v915
        %1126 = vmatmul.bf16.gmra.mxu0 %v654
        %v1127 = vpop.f32.mrf.mxu0
        %v1128 = vadd.f32 %v1079, %v1127
        %v1129 = vpop.f32.mrf.mxu0
        %v1130 = vadd.f32 %v1081, %v1129
        %1131 = vmatmul.bf16.gmra.mxu0 %v659
        %v1132 = vpop.f32.mrf.mxu0
        %v1133 = vadd.f32 %v1084, %v1132
        %v1134 = vpop.f32.mrf.mxu0
        %v1135 = vadd.f32 %v1086, %v1134
        %1136 = vmatmul.bf16.gmra.mxu0 %v664
        %v1137 = vpop.f32.mrf.mxu0
        %v1138 = vadd.f32 %v1089, %v1137
        %v1139 = vpop.f32.mrf.mxu0
        %v1140 = vadd.f32 %v1091, %v1139
        %1141 = vmatmul.bf16.gmra.mxu0 %v669
        %v1142 = vpop.f32.mrf.mxu0
        %v1143 = vadd.f32 %v1094, %v1142
        %v1144 = vpop.f32.mrf.mxu0
        %v1145 = vadd.f32 %v1096, %v1144
        %1146 = vmatmul.bf16.gmra.mxu0 %v674
        %v1147 = vpop.f32.mrf.mxu0
        %v1148 = vadd.f32 %v1099, %v1147
        %v1149 = vpop.f32.mrf.mxu0
        %v1150 = vadd.f32 %v1101, %v1149
        %1151 = vmatmul.bf16.gmra.mxu0 %v679
        %v1152 = vpop.f32.mrf.mxu0
        %v1153 = vadd.f32 %v1104, %v1152
        %v1154 = vpop.f32.mrf.mxu0
        %v1155 = vadd.f32 %v1106, %v1154
        %1156 = vmatmul.bf16.gmra.mxu0 %v684
        %v1157 = vpop.f32.mrf.mxu0
        %v1158 = vadd.f32 %v1109, %v1157
        %v1159 = vpop.f32.mrf.mxu0
        %v1160 = vadd.f32 %v1111, %v1159
        %1161 = vmatmul.bf16.gmra.mxu0 %v689
        %v1162 = vpop.f32.mrf.mxu0
        %v1163 = vadd.f32 %v1114, %v1162
        %v1164 = vpop.f32.mrf.mxu0
        %v1165 = vadd.f32 %v1116, %v1164
        %1166 = vdwg.mxu0
        %1167 = vmatpush.bf16.msra.mxu0 %v930
        %1168 = vmatpush.bf16.msra.mxu0 %v929
        %1169 = vmatpush.bf16.msra.mxu0 %v928
        %1170 = vmatpush.bf16.msra.mxu0 %v927
        %1171 = vmatpush.bf16.msra.mxu0 %v926
        %1172 = vmatpush.bf16.msra.mxu0 %v925
        %1173 = vmatpush.bf16.msra.mxu0 %v924
        %1174 = vmatpush.bf16.msra.mxu0 %v923
        %1175 = vmatmul.bf16.gmra.mxu0 %v655
        %v1176 = vpop.f32.mrf.mxu0
        %v1177 = vadd.f32 %v1128, %v1176
        %v1178 = vpop.f32.mrf.mxu0
        %v1179 = vadd.f32 %v1130, %v1178
        %1180 = vmatmul.bf16.gmra.mxu0 %v660
        %v1181 = vpop.f32.mrf.mxu0
        %v1182 = vadd.f32 %v1133, %v1181
        %v1183 = vpop.f32.mrf.mxu0
        %v1184 = vadd.f32 %v1135, %v1183
        %1185 = vmatmul.bf16.gmra.mxu0 %v665
        %v1186 = vpop.f32.mrf.mxu0
        %v1187 = vadd.f32 %v1138, %v1186
        %v1188 = vpop.f32.mrf.mxu0
        %v1189 = vadd.f32 %v1140, %v1188
        %1190 = vmatmul.bf16.gmra.mxu0 %v670
        %v1191 = vpop.f32.mrf.mxu0
        %v1192 = vadd.f32 %v1143, %v1191
        %v1193 = vpop.f32.mrf.mxu0
        %v1194 = vadd.f32 %v1145, %v1193
        %1195 = vmatmul.bf16.gmra.mxu0 %v675
        %v1196 = vpop.f32.mrf.mxu0
        %v1197 = vadd.f32 %v1148, %v1196
        %v1198 = vpop.f32.mrf.mxu0
        %v1199 = vadd.f32 %v1150, %v1198
        %1200 = vmatmul.bf16.gmra.mxu0 %v680
        %v1201 = vpop.f32.mrf.mxu0
        %v1202 = vadd.f32 %v1153, %v1201
        %v1203 = vpop.f32.mrf.mxu0
        %v1204 = vadd.f32 %v1155, %v1203
        %1205 = vmatmul.bf16.gmra.mxu0 %v685
        %v1206 = vpop.f32.mrf.mxu0
        %v1207 = vadd.f32 %v1158, %v1206
        %v1208 = vpop.f32.mrf.mxu0
        %v1209 = vadd.f32 %v1160, %v1208
        %1210 = vmatmul.bf16.gmra.mxu0 %v690
        %v1211 = vpop.f32.mrf.mxu0
        %v1212 = vadd.f32 %v1163, %v1211
        %v1213 = vpop.f32.mrf.mxu0
        %v1214 = vadd.f32 %v1165, %v1213
        %1215 = vdwg.mxu0
        %v1216 = vpack.c.bf16 %v1177, %v1177
        %v1217 = vpack.c.bf16 %v1179, %v1179
        %v1218 = vpack.c.bf16 %v1182, %v1182
        %v1219 = vpack.c.bf16 %v1184, %v1184
        %v1220 = vpack.c.bf16 %v1187, %v1187
        %v1221 = vpack.c.bf16 %v1189, %v1189
        %v1222 = vpack.c.bf16 %v1192, %v1192
        %v1223 = vpack.c.bf16 %v1194, %v1194
        %v1224 = vpack.c.bf16 %v1197, %v1197
        %v1225 = vpack.c.bf16 %v1199, %v1199
        %v1226 = vpack.c.bf16 %v1202, %v1202
        %v1227 = vpack.c.bf16 %v1204, %v1204
        %v1228 = vpack.c.bf16 %v1207, %v1207
        %v1229 = vpack.c.bf16 %v1209, %v1209
        %v1230 = vpack.c.bf16 %v1212, %v1212
        %v1231 = vpack.c.bf16 %v1214, %v1214
        %s1232 = sshra.s32 %s390, 3
        %s1233 = sand.u32 %s390, 7
        %s1234 = smul.addr %s1232, 4
        %s1235 = scalar_lea.vmem [#allocation2], %s1234
        %vm1236 = vcmask 519168
        %1237 = vst.msk [vmem:[%s1235] sm:$0xf] %vm1236, %v1216
        %1238 = vst.msk [vmem:[%s1235 + $0x4] sm:$0xf] %vm1236, %v1217
        %1239 = vst.msk [vmem:[%s1235 + $0x8] sm:$0xf] %vm1236, %v1218
        %1240 = vst.msk [vmem:[%s1235 + $0xc] sm:$0xf] %vm1236, %v1219
        %1241 = vst.msk [vmem:[%s1235 + $0x10] sm:$0xf] %vm1236, %v1220
        %1242 = vst.msk [vmem:[%s1235 + $0x14] sm:$0xf] %vm1236, %v1221
        %1243 = vst.msk [vmem:[%s1235 + $0x18] sm:$0xf] %vm1236, %v1222
        %1244 = vst.msk [vmem:[%s1235 + $0x1c] sm:$0xf] %vm1236, %v1223
        %1245 = vst.msk [vmem:[%s1235 + $0x20] sm:$0xf] %vm1236, %v1224
        %1246 = vst.msk [vmem:[%s1235 + $0x24] sm:$0xf] %vm1236, %v1225
        %1247 = vst.msk [vmem:[%s1235 + $0x28] sm:$0xf] %vm1236, %v1226
        %1248 = vst.msk [vmem:[%s1235 + $0x2c] sm:$0xf] %vm1236, %v1227
        %1249 = vst.msk [vmem:[%s1235 + $0x30] sm:$0xf] %vm1236, %v1228
        %1250 = vst.msk [vmem:[%s1235 + $0x34] sm:$0xf] %vm1236, %v1229
        %1251 = vst.msk [vmem:[%s1235 + $0x38] sm:$0xf] %vm1236, %v1230
        %1252 = vst.msk [vmem:[%s1235 + $0x3c] sm:$0xf] %vm1236, %v1231
      $region56: #{gnn_forward.1} parent=51 // pred_fallthru
        _
      %p1253 = scmp.eq.s32.totalorder %s23, 1
      // Predicated region
      $region57: #{gnn_forward.1} parent=51 // pred_check
        %p1254 = pneg %p1253
      $region58: #{gnn_forward.1} parent=51 // pred_check_branch
        %1256 = sbr.rel (%p1254) target = $region60
      $region59: #{gnn_forward.1} parent=51 // pred_region
        %v1257 = vld [vmem:[%s374] sm:$0xff]
        %v1258 = vld [vmem:[%s374 + $0x8] sm:$0xff]
        %v1259 = vld [vmem:[%s374 + $0x10] sm:$0xff]
        %v1260 = vld [vmem:[%s374 + $0x18] sm:$0xff]
        %v1261 = vld [vmem:[%s374 + $0x20] sm:$0xff]
        %v1262 = vld [vmem:[%s374 + $0x28] sm:$0xff]
        %v1263 = vld [vmem:[%s374 + $0x30] sm:$0xff]
        %v1264 = vld [vmem:[%s374 + $0x38] sm:$0xff]
        %v1265 = vld [vmem:[%s374 + $0x40] sm:$0xff]
        %v1266 = vld [vmem:[%s374 + $0x48] sm:$0xff]
        %v1267 = vld [vmem:[%s374 + $0x50] sm:$0xff]
        %v1268 = vld [vmem:[%s374 + $0x58] sm:$0xff]
        %v1269 = vld [vmem:[%s374 + $0x60] sm:$0xff]
        %v1270 = vld [vmem:[%s374 + $0x68] sm:$0xff]
        %v1271 = vld [vmem:[%s374 + $0x70] sm:$0xff]
        %v1272 = vld [vmem:[%s374 + $0x78] sm:$0xff]
        %v1273 = vld [vmem:[#allocation2] sm:$0xf]
        %v1274 = vld [vmem:[#allocation2 + $0x4] sm:$0xf]
        %v1275 = vld [vmem:[#allocation2 + $0x8] sm:$0xf]
        %v1276 = vld [vmem:[#allocation2 + $0xc] sm:$0xf]
        %v1277 = vld [vmem:[#allocation2 + $0x10] sm:$0xf]
        %v1278 = vld [vmem:[#allocation2 + $0x14] sm:$0xf]
        %v1279 = vld [vmem:[#allocation2 + $0x18] sm:$0xf]
        %v1280 = vld [vmem:[#allocation2 + $0x1c] sm:$0xf]
        %v1281 = vld [vmem:[#allocation2 + $0x20] sm:$0xf]
        %v1282 = vld [vmem:[#allocation2 + $0x24] sm:$0xf]
        %v1283 = vld [vmem:[#allocation2 + $0x28] sm:$0xf]
        %v1284 = vld [vmem:[#allocation2 + $0x2c] sm:$0xf]
        %v1285 = vld [vmem:[#allocation2 + $0x30] sm:$0xf]
        %v1286 = vld [vmem:[#allocation2 + $0x34] sm:$0xf]
        %v1287 = vld [vmem:[#allocation2 + $0x38] sm:$0xf]
        %v1288 = vld [vmem:[#allocation2 + $0x3c] sm:$0xf]
        %v1289 = vld [vmem:[#allocation2 + $0x40] sm:$0xf]
        %v1290 = vld [vmem:[#allocation2 + $0x44] sm:$0xf]
        %v1291 = vld [vmem:[#allocation2 + $0x48] sm:$0xf]
        %v1292 = vld [vmem:[#allocation2 + $0x4c] sm:$0xf]
        %v1293 = vld [vmem:[#allocation2 + $0x50] sm:$0xf]
        %v1294 = vld [vmem:[#allocation2 + $0x54] sm:$0xf]
        %v1295 = vld [vmem:[#allocation2 + $0x58] sm:$0xf]
        %v1296 = vld [vmem:[#allocation2 + $0x5c] sm:$0xf]
        %v1297 = vld [vmem:[#allocation2 + $0x60] sm:$0xf]
        %v1298 = vld [vmem:[#allocation2 + $0x64] sm:$0xf]
        %v1299 = vld [vmem:[#allocation2 + $0x68] sm:$0xf]
        %v1300 = vld [vmem:[#allocation2 + $0x6c] sm:$0xf]
        %v1301 = vld [vmem:[#allocation2 + $0x70] sm:$0xf]
        %v1302 = vld [vmem:[#allocation2 + $0x74] sm:$0xf]
        %v1303 = vld [vmem:[#allocation2 + $0x78] sm:$0xf]
        %v1304 = vld [vmem:[#allocation2 + $0x7c] sm:$0xf]
        %v1305 = vld [vmem:[%s3] sm:$0x1]
        %v1307 = vperm.slane %v1305, 0
        %v1325 = vunpack.c.l.b16 %v1257
        %v1326 = vunpack.c.h.b16 %v1257
        %v1327 = vunpack.c.l.b16 %v1258
        %v1328 = vunpack.c.h.b16 %v1258
        %v1329 = vunpack.c.l.b16 %v1259
        %v1330 = vunpack.c.h.b16 %v1259
        %v1331 = vunpack.c.l.b16 %v1260
        %v1332 = vunpack.c.h.b16 %v1260
        %v1333 = vunpack.c.l.b16 %v1261
        %v1334 = vunpack.c.h.b16 %v1261
        %v1335 = vunpack.c.l.b16 %v1262
        %v1336 = vunpack.c.h.b16 %v1262
        %v1337 = vunpack.c.l.b16 %v1263
        %v1338 = vunpack.c.h.b16 %v1263
        %v1339 = vunpack.c.l.b16 %v1264
        %v1340 = vunpack.c.h.b16 %v1264
        %v1341 = vunpack.c.l.b16 %v1265
        %v1342 = vunpack.c.h.b16 %v1265
        %v1343 = vunpack.c.l.b16 %v1266
        %v1344 = vunpack.c.h.b16 %v1266
        %v1345 = vunpack.c.l.b16 %v1267
        %v1346 = vunpack.c.h.b16 %v1267
        %v1347 = vunpack.c.l.b16 %v1268
        %v1348 = vunpack.c.h.b16 %v1268
        %v1349 = vunpack.c.l.b16 %v1269
        %v1350 = vunpack.c.h.b16 %v1269
        %v1351 = vunpack.c.l.b16 %v1270
        %v1352 = vunpack.c.h.b16 %v1270
        %v1353 = vunpack.c.l.b16 %v1271
        %v1354 = vunpack.c.h.b16 %v1271
        %v1355 = vunpack.c.l.b16 %v1272
        %v1356 = vunpack.c.h.b16 %v1272
        %v1357 = vpack.c.b16 %v1327, %v1325
        %v1358 = vpack.c.b16 %v1328, %v1326
        %v1359 = vpack.c.b16 %v1331, %v1329
        %v1360 = vpack.c.b16 %v1332, %v1330
        %v1361 = vpack.c.b16 %v1335, %v1333
        %v1362 = vpack.c.b16 %v1336, %v1334
        %v1363 = vpack.c.b16 %v1339, %v1337
        %v1364 = vpack.c.b16 %v1340, %v1338
        %v1365 = vpack.c.b16 %v1343, %v1341
        %v1366 = vpack.c.b16 %v1344, %v1342
        %v1367 = vpack.c.b16 %v1347, %v1345
        %v1368 = vpack.c.b16 %v1348, %v1346
        %v1369 = vpack.c.b16 %v1351, %v1349
        %v1370 = vpack.c.b16 %v1352, %v1350
        %v1371 = vpack.c.b16 %v1355, %v1353
        %v1372 = vpack.c.b16 %v1356, %v1354
        %v1421 = vunpack.c.l.b16 %v1273
        %v1422 = vunpack.c.l.b16 %v1274
        %v1423 = vunpack.c.l.b16 %v1275
        %v1424 = vunpack.c.l.b16 %v1276
        %v1425 = vunpack.c.l.b16 %v1277
        %v1426 = vunpack.c.l.b16 %v1278
        %v1427 = vunpack.c.l.b16 %v1279
        %v1428 = vunpack.c.l.b16 %v1280
        %v1429 = vunpack.c.l.b16 %v1281
        %v1430 = vunpack.c.l.b16 %v1282
        %v1431 = vunpack.c.l.b16 %v1283
        %v1432 = vunpack.c.l.b16 %v1284
        %v1433 = vunpack.c.l.b16 %v1285
        %v1434 = vunpack.c.l.b16 %v1286
        %v1435 = vunpack.c.l.b16 %v1287
        %v1436 = vunpack.c.l.b16 %v1288
        %v1437 = vunpack.c.l.b16 %v1289
        %v1438 = vunpack.c.l.b16 %v1290
        %v1439 = vunpack.c.l.b16 %v1291
        %v1440 = vunpack.c.l.b16 %v1292
        %v1441 = vunpack.c.l.b16 %v1293
        %v1442 = vunpack.c.l.b16 %v1294
        %v1443 = vunpack.c.l.b16 %v1295
        %v1444 = vunpack.c.l.b16 %v1296
        %v1445 = vunpack.c.l.b16 %v1297
        %v1446 = vunpack.c.l.b16 %v1298
        %v1447 = vunpack.c.l.b16 %v1299
        %v1448 = vunpack.c.l.b16 %v1300
        %v1449 = vunpack.c.l.b16 %v1301
        %v1450 = vunpack.c.l.b16 %v1302
        %v1451 = vunpack.c.l.b16 %v1303
        %v1452 = vunpack.c.l.b16 %v1304
        %v1453 = vpack.c.b16 %v1422, %v1421
        %v1454 = vpack.c.b16 %v1424, %v1423
        %v1455 = vpack.c.b16 %v1426, %v1425
        %v1456 = vpack.c.b16 %v1428, %v1427
        %v1457 = vpack.c.b16 %v1430, %v1429
        %v1458 = vpack.c.b16 %v1432, %v1431
        %v1459 = vpack.c.b16 %v1434, %v1433
        %v1460 = vpack.c.b16 %v1436, %v1435
        %v1461 = vpack.c.b16 %v1438, %v1437
        %v1462 = vpack.c.b16 %v1440, %v1439
        %v1463 = vpack.c.b16 %v1442, %v1441
        %v1464 = vpack.c.b16 %v1444, %v1443
        %v1465 = vpack.c.b16 %v1446, %v1445
        %v1466 = vpack.c.b16 %v1448, %v1447
        %v1467 = vpack.c.b16 %v1450, %v1449
        %v1468 = vpack.c.b16 %v1452, %v1451
        %1485 = vmatpush.bf16.msra.mxu0 %v1460
        %1486 = vmatpush.bf16.msra.mxu0 %v1459
        %1487 = vmatpush.bf16.msra.mxu0 %v1458
        %1488 = vmatpush.bf16.msra.mxu0 %v1457
        %1489 = vmatpush.bf16.msra.mxu0 %v1456
        %1490 = vmatpush.bf16.msra.mxu0 %v1455
        %1491 = vmatpush.bf16.msra.mxu0 %v1454
        %1492 = vmatpush.bf16.msra.mxu0 %v1453
        %1493 = vmatmul.bf16.gmra.mxu0 %v1357
        %v1494 = vpop.f32.mrf.mxu0
        %v1495 = vadd.f32 %v1307, %v1494
        %v1496 = vpop.f32.mrf.mxu0
        %v1497 = vadd.f32 %v1307, %v1496
        %1498 = vmatmul.bf16.gmra.mxu0 %v1359
        %v1499 = vpop.f32.mrf.mxu0
        %v1500 = vadd.f32 %v1307, %v1499
        %v1501 = vpop.f32.mrf.mxu0
        %v1502 = vadd.f32 %v1307, %v1501
        %1503 = vmatmul.bf16.gmra.mxu0 %v1361
        %v1504 = vpop.f32.mrf.mxu0
        %v1505 = vadd.f32 %v1307, %v1504
        %v1506 = vpop.f32.mrf.mxu0
        %v1507 = vadd.f32 %v1307, %v1506
        %1508 = vmatmul.bf16.gmra.mxu0 %v1363
        %v1509 = vpop.f32.mrf.mxu0
        %v1510 = vadd.f32 %v1307, %v1509
        %v1511 = vpop.f32.mrf.mxu0
        %v1512 = vadd.f32 %v1307, %v1511
        %1513 = vmatmul.bf16.gmra.mxu0 %v1365
        %v1514 = vpop.f32.mrf.mxu0
        %v1515 = vadd.f32 %v1307, %v1514
        %v1516 = vpop.f32.mrf.mxu0
        %v1517 = vadd.f32 %v1307, %v1516
        %1518 = vmatmul.bf16.gmra.mxu0 %v1367
        %v1519 = vpop.f32.mrf.mxu0
        %v1520 = vadd.f32 %v1307, %v1519
        %v1521 = vpop.f32.mrf.mxu0
        %v1522 = vadd.f32 %v1307, %v1521
        %1523 = vmatmul.bf16.gmra.mxu0 %v1369
        %v1524 = vpop.f32.mrf.mxu0
        %v1525 = vadd.f32 %v1307, %v1524
        %v1526 = vpop.f32.mrf.mxu0
        %v1527 = vadd.f32 %v1307, %v1526
        %1528 = vmatmul.bf16.gmra.mxu0 %v1371
        %v1529 = vpop.f32.mrf.mxu0
        %v1530 = vadd.f32 %v1307, %v1529
        %v1531 = vpop.f32.mrf.mxu0
        %v1532 = vadd.f32 %v1307, %v1531
        %1533 = vdwg.mxu0
        %1534 = vmatpush.bf16.msra.mxu0 %v1468
        %1535 = vmatpush.bf16.msra.mxu0 %v1467
        %1536 = vmatpush.bf16.msra.mxu0 %v1466
        %1537 = vmatpush.bf16.msra.mxu0 %v1465
        %1538 = vmatpush.bf16.msra.mxu0 %v1464
        %1539 = vmatpush.bf16.msra.mxu0 %v1463
        %1540 = vmatpush.bf16.msra.mxu0 %v1462
        %1541 = vmatpush.bf16.msra.mxu0 %v1461
        %1542 = vmatmul.bf16.gmra.mxu0 %v1358
        %v1543 = vpop.f32.mrf.mxu0
        %v1544 = vadd.f32 %v1495, %v1543
        %v1545 = vpop.f32.mrf.mxu0
        %v1546 = vadd.f32 %v1497, %v1545
        %1547 = vmatmul.bf16.gmra.mxu0 %v1360
        %v1548 = vpop.f32.mrf.mxu0
        %v1549 = vadd.f32 %v1500, %v1548
        %v1550 = vpop.f32.mrf.mxu0
        %v1551 = vadd.f32 %v1502, %v1550
        %1552 = vmatmul.bf16.gmra.mxu0 %v1362
        %v1553 = vpop.f32.mrf.mxu0
        %v1554 = vadd.f32 %v1505, %v1553
        %v1555 = vpop.f32.mrf.mxu0
        %v1556 = vadd.f32 %v1507, %v1555
        %1557 = vmatmul.bf16.gmra.mxu0 %v1364
        %v1558 = vpop.f32.mrf.mxu0
        %v1559 = vadd.f32 %v1510, %v1558
        %v1560 = vpop.f32.mrf.mxu0
        %v1561 = vadd.f32 %v1512, %v1560
        %1562 = vmatmul.bf16.gmra.mxu0 %v1366
        %v1563 = vpop.f32.mrf.mxu0
        %v1564 = vadd.f32 %v1515, %v1563
        %v1565 = vpop.f32.mrf.mxu0
        %v1566 = vadd.f32 %v1517, %v1565
        %1567 = vmatmul.bf16.gmra.mxu0 %v1368
        %v1568 = vpop.f32.mrf.mxu0
        %v1569 = vadd.f32 %v1520, %v1568
        %v1570 = vpop.f32.mrf.mxu0
        %v1571 = vadd.f32 %v1522, %v1570
        %1572 = vmatmul.bf16.gmra.mxu0 %v1370
        %v1573 = vpop.f32.mrf.mxu0
        %v1574 = vadd.f32 %v1525, %v1573
        %v1575 = vpop.f32.mrf.mxu0
        %v1576 = vadd.f32 %v1527, %v1575
        %1577 = vmatmul.bf16.gmra.mxu0 %v1372
        %v1578 = vpop.f32.mrf.mxu0
        %v1579 = vadd.f32 %v1530, %v1578
        %v1580 = vpop.f32.mrf.mxu0
        %v1581 = vadd.f32 %v1532, %v1580
        %1582 = vdwg.mxu0
        %v1583 = vmax.f32 %v1544, 0.0
        %v1584 = vmax.f32 %v1546, 0.0
        %v1585 = vmax.f32 %v1549, 0.0
        %v1586 = vmax.f32 %v1551, 0.0
        %v1587 = vmax.f32 %v1554, 0.0
        %v1588 = vmax.f32 %v1556, 0.0
        %v1589 = vmax.f32 %v1559, 0.0
        %v1590 = vmax.f32 %v1561, 0.0
        %v1591 = vmax.f32 %v1564, 0.0
        %v1592 = vmax.f32 %v1566, 0.0
        %v1593 = vmax.f32 %v1569, 0.0
        %v1594 = vmax.f32 %v1571, 0.0
        %v1595 = vmax.f32 %v1574, 0.0
        %v1596 = vmax.f32 %v1576, 0.0
        %v1597 = vmax.f32 %v1579, 0.0
        %v1598 = vmax.f32 %v1581, 0.0
        %v1599 = vpack.c.bf16 %v1584, %v1583
        %v1600 = vpack.c.bf16 %v1586, %v1585
        %v1601 = vpack.c.bf16 %v1588, %v1587
        %v1602 = vpack.c.bf16 %v1590, %v1589
        %v1603 = vpack.c.bf16 %v1592, %v1591
        %v1604 = vpack.c.bf16 %v1594, %v1593
        %v1605 = vpack.c.bf16 %v1596, %v1595
        %v1606 = vpack.c.bf16 %v1598, %v1597
        %v1607 = vld [vmem:[%s4] sm:$0xf]
        %v1608 = vld [vmem:[%s4 + $0x4] sm:$0xf]
        %v1609 = vld [vmem:[%s4 + $0x8] sm:$0xf]
        %v1610 = vld [vmem:[%s4 + $0xc] sm:$0xf]
        %v1611 = vld [vmem:[%s4 + $0x10] sm:$0xf]
        %v1612 = vld [vmem:[%s4 + $0x14] sm:$0xf]
        %v1613 = vld [vmem:[%s4 + $0x18] sm:$0xf]
        %v1614 = vld [vmem:[%s4 + $0x1c] sm:$0xf]
        %v1623 = vunpack.c.l.b16 %v1607
        %v1624 = vunpack.c.l.b16 %v1608
        %v1625 = vunpack.c.l.b16 %v1609
        %v1626 = vunpack.c.l.b16 %v1610
        %v1627 = vunpack.c.l.b16 %v1611
        %v1628 = vunpack.c.l.b16 %v1612
        %v1629 = vunpack.c.l.b16 %v1613
        %v1630 = vunpack.c.l.b16 %v1614
        %v1631 = vpack.c.b16 %v1624, %v1623
        %v1632 = vpack.c.b16 %v1626, %v1625
        %v1633 = vpack.c.b16 %v1628, %v1627
        %v1634 = vpack.c.b16 %v1630, %v1629
        %vm1639 = vcmask 523264
        %v1641 = vsel %vm1639, %v1599, 0
        %v1644 = vsel %vm1639, %v1600, 0
        %v1647 = vsel %vm1639, %v1601, 0
        %v1650 = vsel %vm1639, %v1602, 0
        %v1653 = vsel %vm1639, %v1603, 0
        %v1656 = vsel %vm1639, %v1604, 0
        %v1659 = vsel %vm1639, %v1605, 0
        %v1662 = vsel %vm1639, %v1606, 0
        %1664 = vmatpush.bf16.msra.mxu0 0
        %1665 = vmatpush.bf16.msra.mxu0 0
        %1666 = vmatpush.bf16.msra.mxu0 0
        %1667 = vmatpush.bf16.msra.mxu0 0
        %1668 = vmatpush.bf16.msra.mxu0 %v1634
        %1669 = vmatpush.bf16.msra.mxu0 %v1633
        %1670 = vmatpush.bf16.msra.mxu0 %v1632
        %1671 = vmatpush.bf16.msra.mxu0 %v1631
        %1672 = vmatmul.bf16.gmra.mxu0 %v1641
        %v1673 = vpop.f32.mrf.mxu0
        %v1674 = vadd.f32 0.0, %v1673
        %v1675 = vpop.f32.mrf.mxu0
        %v1676 = vadd.f32 0.0, %v1675
        %1677 = vmatmul.bf16.gmra.mxu0 %v1644
        %v1678 = vpop.f32.mrf.mxu0
        %v1679 = vadd.f32 0.0, %v1678
        %v1680 = vpop.f32.mrf.mxu0
        %v1681 = vadd.f32 0.0, %v1680
        %1682 = vmatmul.bf16.gmra.mxu0 %v1647
        %v1683 = vpop.f32.mrf.mxu0
        %v1684 = vadd.f32 0.0, %v1683
        %v1685 = vpop.f32.mrf.mxu0
        %v1686 = vadd.f32 0.0, %v1685
        %1687 = vmatmul.bf16.gmra.mxu0 %v1650
        %v1688 = vpop.f32.mrf.mxu0
        %v1689 = vadd.f32 0.0, %v1688
        %v1690 = vpop.f32.mrf.mxu0
        %v1691 = vadd.f32 0.0, %v1690
        %1692 = vmatmul.bf16.gmra.mxu0 %v1653
        %v1693 = vpop.f32.mrf.mxu0
        %v1694 = vadd.f32 0.0, %v1693
        %v1695 = vpop.f32.mrf.mxu0
        %v1696 = vadd.f32 0.0, %v1695
        %1697 = vmatmul.bf16.gmra.mxu0 %v1656
        %v1698 = vpop.f32.mrf.mxu0
        %v1699 = vadd.f32 0.0, %v1698
        %v1700 = vpop.f32.mrf.mxu0
        %v1701 = vadd.f32 0.0, %v1700
        %1702 = vmatmul.bf16.gmra.mxu0 %v1659
        %v1703 = vpop.f32.mrf.mxu0
        %v1704 = vadd.f32 0.0, %v1703
        %v1705 = vpop.f32.mrf.mxu0
        %v1706 = vadd.f32 0.0, %v1705
        %1707 = vmatmul.bf16.gmra.mxu0 %v1662
        %v1708 = vpop.f32.mrf.mxu0
        %v1709 = vadd.f32 0.0, %v1708
        %v1710 = vpop.f32.mrf.mxu0
        %v1711 = vadd.f32 0.0, %v1710
        %1712 = vdwg.mxu0
        %v1713 = vpack.c.bf16 %v1674, %v1674
        %v1714 = vpack.c.bf16 %v1676, %v1676
        %v1715 = vpack.c.bf16 %v1679, %v1679
        %v1716 = vpack.c.bf16 %v1681, %v1681
        %v1717 = vpack.c.bf16 %v1684, %v1684
        %v1718 = vpack.c.bf16 %v1686, %v1686
        %v1719 = vpack.c.bf16 %v1689, %v1689
        %v1720 = vpack.c.bf16 %v1691, %v1691
        %v1721 = vpack.c.bf16 %v1694, %v1694
        %v1722 = vpack.c.bf16 %v1696, %v1696
        %v1723 = vpack.c.bf16 %v1699, %v1699
        %v1724 = vpack.c.bf16 %v1701, %v1701
        %v1725 = vpack.c.bf16 %v1704, %v1704
        %v1726 = vpack.c.bf16 %v1706, %v1706
        %v1727 = vpack.c.bf16 %v1709, %v1709
        %v1728 = vpack.c.bf16 %v1711, %v1711
        %s1729 = sshra.s32 %s390, 3
        %s1730 = sand.u32 %s390, 7
        %s1731 = smul.addr %s1729, 4
        %s1732 = scalar_lea.vmem [#allocation3], %s1731
        %vm1733 = vcmask 519168
        %1734 = vst.msk [vmem:[%s1732] sm:$0xf] %vm1733, %v1713
        %1735 = vst.msk [vmem:[%s1732 + $0x4] sm:$0xf] %vm1733, %v1714
        %1736 = vst.msk [vmem:[%s1732 + $0x8] sm:$0xf] %vm1733, %v1715
        %1737 = vst.msk [vmem:[%s1732 + $0xc] sm:$0xf] %vm1733, %v1716
        %1738 = vst.msk [vmem:[%s1732 + $0x10] sm:$0xf] %vm1733, %v1717
        %1739 = vst.msk [vmem:[%s1732 + $0x14] sm:$0xf] %vm1733, %v1718
        %1740 = vst.msk [vmem:[%s1732 + $0x18] sm:$0xf] %vm1733, %v1719
        %1741 = vst.msk [vmem:[%s1732 + $0x1c] sm:$0xf] %vm1733, %v1720
        %1742 = vst.msk [vmem:[%s1732 + $0x20] sm:$0xf] %vm1733, %v1721
        %1743 = vst.msk [vmem:[%s1732 + $0x24] sm:$0xf] %vm1733, %v1722
        %1744 = vst.msk [vmem:[%s1732 + $0x28] sm:$0xf] %vm1733, %v1723
        %1745 = vst.msk [vmem:[%s1732 + $0x2c] sm:$0xf] %vm1733, %v1724
        %1746 = vst.msk [vmem:[%s1732 + $0x30] sm:$0xf] %vm1733, %v1725
        %1747 = vst.msk [vmem:[%s1732 + $0x34] sm:$0xf] %vm1733, %v1726
        %1748 = vst.msk [vmem:[%s1732 + $0x38] sm:$0xf] %vm1733, %v1727
        %1749 = vst.msk [vmem:[%s1732 + $0x3c] sm:$0xf] %vm1733, %v1728
      $region60: #{gnn_forward.1} parent=51 // pred_fallthru
        _
      %p1750 = scmp.eq.s32.totalorder %s23, 2
      // Predicated region
      $region61: #{gnn_forward.1} parent=51 // pred_check
        %p1751 = pneg %p1750
      $region62: #{gnn_forward.1} parent=51 // pred_check_branch
        %1753 = sbr.rel (%p1751) target = $region64
      $region63: #{gnn_forward.1} parent=51 // pred_region
        %v1754 = vld [vmem:[%s374] sm:$0xff]
        %v1755 = vld [vmem:[%s374 + $0x8] sm:$0xff]
        %v1756 = vld [vmem:[%s374 + $0x10] sm:$0xff]
        %v1757 = vld [vmem:[%s374 + $0x18] sm:$0xff]
        %v1758 = vld [vmem:[%s374 + $0x20] sm:$0xff]
        %v1759 = vld [vmem:[%s374 + $0x28] sm:$0xff]
        %v1760 = vld [vmem:[%s374 + $0x30] sm:$0xff]
        %v1761 = vld [vmem:[%s374 + $0x38] sm:$0xff]
        %v1762 = vld [vmem:[%s374 + $0x40] sm:$0xff]
        %v1763 = vld [vmem:[%s374 + $0x48] sm:$0xff]
        %v1764 = vld [vmem:[%s374 + $0x50] sm:$0xff]
        %v1765 = vld [vmem:[%s374 + $0x58] sm:$0xff]
        %v1766 = vld [vmem:[%s374 + $0x60] sm:$0xff]
        %v1767 = vld [vmem:[%s374 + $0x68] sm:$0xff]
        %v1768 = vld [vmem:[%s374 + $0x70] sm:$0xff]
        %v1769 = vld [vmem:[%s374 + $0x78] sm:$0xff]
        %v1770 = vld [vmem:[#allocation3] sm:$0xf]
        %v1771 = vld [vmem:[#allocation3 + $0x4] sm:$0xf]
        %v1772 = vld [vmem:[#allocation3 + $0x8] sm:$0xf]
        %v1773 = vld [vmem:[#allocation3 + $0xc] sm:$0xf]
        %v1774 = vld [vmem:[#allocation3 + $0x10] sm:$0xf]
        %v1775 = vld [vmem:[#allocation3 + $0x14] sm:$0xf]
        %v1776 = vld [vmem:[#allocation3 + $0x18] sm:$0xf]
        %v1777 = vld [vmem:[#allocation3 + $0x1c] sm:$0xf]
        %v1778 = vld [vmem:[#allocation3 + $0x20] sm:$0xf]
        %v1779 = vld [vmem:[#allocation3 + $0x24] sm:$0xf]
        %v1780 = vld [vmem:[#allocation3 + $0x28] sm:$0xf]
        %v1781 = vld [vmem:[#allocation3 + $0x2c] sm:$0xf]
        %v1782 = vld [vmem:[#allocation3 + $0x30] sm:$0xf]
        %v1783 = vld [vmem:[#allocation3 + $0x34] sm:$0xf]
        %v1784 = vld [vmem:[#allocation3 + $0x38] sm:$0xf]
        %v1785 = vld [vmem:[#allocation3 + $0x3c] sm:$0xf]
        %v1786 = vld [vmem:[#allocation3 + $0x40] sm:$0xf]
        %v1787 = vld [vmem:[#allocation3 + $0x44] sm:$0xf]
        %v1788 = vld [vmem:[#allocation3 + $0x48] sm:$0xf]
        %v1789 = vld [vmem:[#allocation3 + $0x4c] sm:$0xf]
        %v1790 = vld [vmem:[#allocation3 + $0x50] sm:$0xf]
        %v1791 = vld [vmem:[#allocation3 + $0x54] sm:$0xf]
        %v1792 = vld [vmem:[#allocation3 + $0x58] sm:$0xf]
        %v1793 = vld [vmem:[#allocation3 + $0x5c] sm:$0xf]
        %v1794 = vld [vmem:[#allocation3 + $0x60] sm:$0xf]
        %v1795 = vld [vmem:[#allocation3 + $0x64] sm:$0xf]
        %v1796 = vld [vmem:[#allocation3 + $0x68] sm:$0xf]
        %v1797 = vld [vmem:[#allocation3 + $0x6c] sm:$0xf]
        %v1798 = vld [vmem:[#allocation3 + $0x70] sm:$0xf]
        %v1799 = vld [vmem:[#allocation3 + $0x74] sm:$0xf]
        %v1800 = vld [vmem:[#allocation3 + $0x78] sm:$0xf]
        %v1801 = vld [vmem:[#allocation3 + $0x7c] sm:$0xf]
        %v1802 = vld [vmem:[%s5] sm:$0x1]
        %v1804 = vperm.slane %v1802, 0
        %v1822 = vunpack.c.l.b16 %v1754
        %v1823 = vunpack.c.h.b16 %v1754
        %v1824 = vunpack.c.l.b16 %v1755
        %v1825 = vunpack.c.h.b16 %v1755
        %v1826 = vunpack.c.l.b16 %v1756
        %v1827 = vunpack.c.h.b16 %v1756
        %v1828 = vunpack.c.l.b16 %v1757
        %v1829 = vunpack.c.h.b16 %v1757
        %v1830 = vunpack.c.l.b16 %v1758
        %v1831 = vunpack.c.h.b16 %v1758
        %v1832 = vunpack.c.l.b16 %v1759
        %v1833 = vunpack.c.h.b16 %v1759
        %v1834 = vunpack.c.l.b16 %v1760
        %v1835 = vunpack.c.h.b16 %v1760
        %v1836 = vunpack.c.l.b16 %v1761
        %v1837 = vunpack.c.h.b16 %v1761
        %v1838 = vunpack.c.l.b16 %v1762
        %v1839 = vunpack.c.h.b16 %v1762
        %v1840 = vunpack.c.l.b16 %v1763
        %v1841 = vunpack.c.h.b16 %v1763
        %v1842 = vunpack.c.l.b16 %v1764
        %v1843 = vunpack.c.h.b16 %v1764
        %v1844 = vunpack.c.l.b16 %v1765
        %v1845 = vunpack.c.h.b16 %v1765
        %v1846 = vunpack.c.l.b16 %v1766
        %v1847 = vunpack.c.h.b16 %v1766
        %v1848 = vunpack.c.l.b16 %v1767
        %v1849 = vunpack.c.h.b16 %v1767
        %v1850 = vunpack.c.l.b16 %v1768
        %v1851 = vunpack.c.h.b16 %v1768
        %v1852 = vunpack.c.l.b16 %v1769
        %v1853 = vunpack.c.h.b16 %v1769
        %v1854 = vpack.c.b16 %v1824, %v1822
        %v1855 = vpack.c.b16 %v1825, %v1823
        %v1856 = vpack.c.b16 %v1828, %v1826
        %v1857 = vpack.c.b16 %v1829, %v1827
        %v1858 = vpack.c.b16 %v1832, %v1830
        %v1859 = vpack.c.b16 %v1833, %v1831
        %v1860 = vpack.c.b16 %v1836, %v1834
        %v1861 = vpack.c.b16 %v1837, %v1835
        %v1862 = vpack.c.b16 %v1840, %v1838
        %v1863 = vpack.c.b16 %v1841, %v1839
        %v1864 = vpack.c.b16 %v1844, %v1842
        %v1865 = vpack.c.b16 %v1845, %v1843
        %v1866 = vpack.c.b16 %v1848, %v1846
        %v1867 = vpack.c.b16 %v1849, %v1847
        %v1868 = vpack.c.b16 %v1852, %v1850
        %v1869 = vpack.c.b16 %v1853, %v1851
        %v1918 = vunpack.c.l.b16 %v1770
        %v1919 = vunpack.c.l.b16 %v1771
        %v1920 = vunpack.c.l.b16 %v1772
        %v1921 = vunpack.c.l.b16 %v1773
        %v1922 = vunpack.c.l.b16 %v1774
        %v1923 = vunpack.c.l.b16 %v1775
        %v1924 = vunpack.c.l.b16 %v1776
        %v1925 = vunpack.c.l.b16 %v1777
        %v1926 = vunpack.c.l.b16 %v1778
        %v1927 = vunpack.c.l.b16 %v1779
        %v1928 = vunpack.c.l.b16 %v1780
        %v1929 = vunpack.c.l.b16 %v1781
        %v1930 = vunpack.c.l.b16 %v1782
        %v1931 = vunpack.c.l.b16 %v1783
        %v1932 = vunpack.c.l.b16 %v1784
        %v1933 = vunpack.c.l.b16 %v1785
        %v1934 = vunpack.c.l.b16 %v1786
        %v1935 = vunpack.c.l.b16 %v1787
        %v1936 = vunpack.c.l.b16 %v1788
        %v1937 = vunpack.c.l.b16 %v1789
        %v1938 = vunpack.c.l.b16 %v1790
        %v1939 = vunpack.c.l.b16 %v1791
        %v1940 = vunpack.c.l.b16 %v1792
        %v1941 = vunpack.c.l.b16 %v1793
        %v1942 = vunpack.c.l.b16 %v1794
        %v1943 = vunpack.c.l.b16 %v1795
        %v1944 = vunpack.c.l.b16 %v1796
        %v1945 = vunpack.c.l.b16 %v1797
        %v1946 = vunpack.c.l.b16 %v1798
        %v1947 = vunpack.c.l.b16 %v1799
        %v1948 = vunpack.c.l.b16 %v1800
        %v1949 = vunpack.c.l.b16 %v1801
        %v1950 = vpack.c.b16 %v1919, %v1918
        %v1951 = vpack.c.b16 %v1921, %v1920
        %v1952 = vpack.c.b16 %v1923, %v1922
        %v1953 = vpack.c.b16 %v1925, %v1924
        %v1954 = vpack.c.b16 %v1927, %v1926
        %v1955 = vpack.c.b16 %v1929, %v1928
        %v1956 = vpack.c.b16 %v1931, %v1930
        %v1957 = vpack.c.b16 %v1933, %v1932
        %v1958 = vpack.c.b16 %v1935, %v1934
        %v1959 = vpack.c.b16 %v1937, %v1936
        %v1960 = vpack.c.b16 %v1939, %v1938
        %v1961 = vpack.c.b16 %v1941, %v1940
        %v1962 = vpack.c.b16 %v1943, %v1942
        %v1963 = vpack.c.b16 %v1945, %v1944
        %v1964 = vpack.c.b16 %v1947, %v1946
        %v1965 = vpack.c.b16 %v1949, %v1948
        %1982 = vmatpush.bf16.msra.mxu0 %v1957
        %1983 = vmatpush.bf16.msra.mxu0 %v1956
        %1984 = vmatpush.bf16.msra.mxu0 %v1955
        %1985 = vmatpush.bf16.msra.mxu0 %v1954
        %1986 = vmatpush.bf16.msra.mxu0 %v1953
        %1987 = vmatpush.bf16.msra.mxu0 %v1952
        %1988 = vmatpush.bf16.msra.mxu0 %v1951
        %1989 = vmatpush.bf16.msra.mxu0 %v1950
        %1990 = vmatmul.bf16.gmra.mxu0 %v1854
        %v1991 = vpop.f32.mrf.mxu0
        %v1992 = vadd.f32 %v1804, %v1991
        %v1993 = vpop.f32.mrf.mxu0
        %v1994 = vadd.f32 %v1804, %v1993
        %1995 = vmatmul.bf16.gmra.mxu0 %v1856
        %v1996 = vpop.f32.mrf.mxu0
        %v1997 = vadd.f32 %v1804, %v1996
        %v1998 = vpop.f32.mrf.mxu0
        %v1999 = vadd.f32 %v1804, %v1998
        %2000 = vmatmul.bf16.gmra.mxu0 %v1858
        %v2001 = vpop.f32.mrf.mxu0
        %v2002 = vadd.f32 %v1804, %v2001
        %v2003 = vpop.f32.mrf.mxu0
        %v2004 = vadd.f32 %v1804, %v2003
        %2005 = vmatmul.bf16.gmra.mxu0 %v1860
        %v2006 = vpop.f32.mrf.mxu0
        %v2007 = vadd.f32 %v1804, %v2006
        %v2008 = vpop.f32.mrf.mxu0
        %v2009 = vadd.f32 %v1804, %v2008
        %2010 = vmatmul.bf16.gmra.mxu0 %v1862
        %v2011 = vpop.f32.mrf.mxu0
        %v2012 = vadd.f32 %v1804, %v2011
        %v2013 = vpop.f32.mrf.mxu0
        %v2014 = vadd.f32 %v1804, %v2013
        %2015 = vmatmul.bf16.gmra.mxu0 %v1864
        %v2016 = vpop.f32.mrf.mxu0
        %v2017 = vadd.f32 %v1804, %v2016
        %v2018 = vpop.f32.mrf.mxu0
        %v2019 = vadd.f32 %v1804, %v2018
        %2020 = vmatmul.bf16.gmra.mxu0 %v1866
        %v2021 = vpop.f32.mrf.mxu0
        %v2022 = vadd.f32 %v1804, %v2021
        %v2023 = vpop.f32.mrf.mxu0
        %v2024 = vadd.f32 %v1804, %v2023
        %2025 = vmatmul.bf16.gmra.mxu0 %v1868
        %v2026 = vpop.f32.mrf.mxu0
        %v2027 = vadd.f32 %v1804, %v2026
        %v2028 = vpop.f32.mrf.mxu0
        %v2029 = vadd.f32 %v1804, %v2028
        %2030 = vdwg.mxu0
        %2031 = vmatpush.bf16.msra.mxu0 %v1965
        %2032 = vmatpush.bf16.msra.mxu0 %v1964
        %2033 = vmatpush.bf16.msra.mxu0 %v1963
        %2034 = vmatpush.bf16.msra.mxu0 %v1962
        %2035 = vmatpush.bf16.msra.mxu0 %v1961
        %2036 = vmatpush.bf16.msra.mxu0 %v1960
        %2037 = vmatpush.bf16.msra.mxu0 %v1959
        %2038 = vmatpush.bf16.msra.mxu0 %v1958
        %2039 = vmatmul.bf16.gmra.mxu0 %v1855
        %v2040 = vpop.f32.mrf.mxu0
        %v2041 = vadd.f32 %v1992, %v2040
        %v2042 = vpop.f32.mrf.mxu0
        %v2043 = vadd.f32 %v1994, %v2042
        %2044 = vmatmul.bf16.gmra.mxu0 %v1857
        %v2045 = vpop.f32.mrf.mxu0
        %v2046 = vadd.f32 %v1997, %v2045
        %v2047 = vpop.f32.mrf.mxu0
        %v2048 = vadd.f32 %v1999, %v2047
        %2049 = vmatmul.bf16.gmra.mxu0 %v1859
        %v2050 = vpop.f32.mrf.mxu0
        %v2051 = vadd.f32 %v2002, %v2050
        %v2052 = vpop.f32.mrf.mxu0
        %v2053 = vadd.f32 %v2004, %v2052
        %2054 = vmatmul.bf16.gmra.mxu0 %v1861
        %v2055 = vpop.f32.mrf.mxu0
        %v2056 = vadd.f32 %v2007, %v2055
        %v2057 = vpop.f32.mrf.mxu0
        %v2058 = vadd.f32 %v2009, %v2057
        %2059 = vmatmul.bf16.gmra.mxu0 %v1863
        %v2060 = vpop.f32.mrf.mxu0
        %v2061 = vadd.f32 %v2012, %v2060
        %v2062 = vpop.f32.mrf.mxu0
        %v2063 = vadd.f32 %v2014, %v2062
        %2064 = vmatmul.bf16.gmra.mxu0 %v1865
        %v2065 = vpop.f32.mrf.mxu0
        %v2066 = vadd.f32 %v2017, %v2065
        %v2067 = vpop.f32.mrf.mxu0
        %v2068 = vadd.f32 %v2019, %v2067
        %2069 = vmatmul.bf16.gmra.mxu0 %v1867
        %v2070 = vpop.f32.mrf.mxu0
        %v2071 = vadd.f32 %v2022, %v2070
        %v2072 = vpop.f32.mrf.mxu0
        %v2073 = vadd.f32 %v2024, %v2072
        %2074 = vmatmul.bf16.gmra.mxu0 %v1869
        %v2075 = vpop.f32.mrf.mxu0
        %v2076 = vadd.f32 %v2027, %v2075
        %v2077 = vpop.f32.mrf.mxu0
        %v2078 = vadd.f32 %v2029, %v2077
        %2079 = vdwg.mxu0
        %v2080 = vmax.f32 %v2041, 0.0
        %v2081 = vmax.f32 %v2043, 0.0
        %v2082 = vmax.f32 %v2046, 0.0
        %v2083 = vmax.f32 %v2048, 0.0
        %v2084 = vmax.f32 %v2051, 0.0
        %v2085 = vmax.f32 %v2053, 0.0
        %v2086 = vmax.f32 %v2056, 0.0
        %v2087 = vmax.f32 %v2058, 0.0
        %v2088 = vmax.f32 %v2061, 0.0
        %v2089 = vmax.f32 %v2063, 0.0
        %v2090 = vmax.f32 %v2066, 0.0
        %v2091 = vmax.f32 %v2068, 0.0
        %v2092 = vmax.f32 %v2071, 0.0
        %v2093 = vmax.f32 %v2073, 0.0
        %v2094 = vmax.f32 %v2076, 0.0
        %v2095 = vmax.f32 %v2078, 0.0
        %v2096 = vpack.c.bf16 %v2080, %v2080
        %v2097 = vpack.c.bf16 %v2081, %v2081
        %v2098 = vpack.c.bf16 %v2082, %v2082
        %v2099 = vpack.c.bf16 %v2083, %v2083
        %v2100 = vpack.c.bf16 %v2084, %v2084
        %v2101 = vpack.c.bf16 %v2085, %v2085
        %v2102 = vpack.c.bf16 %v2086, %v2086
        %v2103 = vpack.c.bf16 %v2087, %v2087
        %v2104 = vpack.c.bf16 %v2088, %v2088
        %v2105 = vpack.c.bf16 %v2089, %v2089
        %v2106 = vpack.c.bf16 %v2090, %v2090
        %v2107 = vpack.c.bf16 %v2091, %v2091
        %v2108 = vpack.c.bf16 %v2092, %v2092
        %v2109 = vpack.c.bf16 %v2093, %v2093
        %v2110 = vpack.c.bf16 %v2094, %v2094
        %v2111 = vpack.c.bf16 %v2095, %v2095
        %s2112 = sshra.s32 %s390, 3
        %s2113 = sand.u32 %s390, 7
        %s2114 = smul.addr %s2112, 4
        %s2115 = scalar_lea.vmem [#allocation2], %s2114
        %vm2116 = vcmask 519168
        %2117 = vst.msk [vmem:[%s2115] sm:$0xf] %vm2116, %v2096
        %2118 = vst.msk [vmem:[%s2115 + $0x4] sm:$0xf] %vm2116, %v2097
        %2119 = vst.msk [vmem:[%s2115 + $0x8] sm:$0xf] %vm2116, %v2098
        %2120 = vst.msk [vmem:[%s2115 + $0xc] sm:$0xf] %vm2116, %v2099
        %2121 = vst.msk [vmem:[%s2115 + $0x10] sm:$0xf] %vm2116, %v2100
        %2122 = vst.msk [vmem:[%s2115 + $0x14] sm:$0xf] %vm2116, %v2101
        %2123 = vst.msk [vmem:[%s2115 + $0x18] sm:$0xf] %vm2116, %v2102
        %2124 = vst.msk [vmem:[%s2115 + $0x1c] sm:$0xf] %vm2116, %v2103
        %2125 = vst.msk [vmem:[%s2115 + $0x20] sm:$0xf] %vm2116, %v2104
        %2126 = vst.msk [vmem:[%s2115 + $0x24] sm:$0xf] %vm2116, %v2105
        %2127 = vst.msk [vmem:[%s2115 + $0x28] sm:$0xf] %vm2116, %v2106
        %2128 = vst.msk [vmem:[%s2115 + $0x2c] sm:$0xf] %vm2116, %v2107
        %2129 = vst.msk [vmem:[%s2115 + $0x30] sm:$0xf] %vm2116, %v2108
        %2130 = vst.msk [vmem:[%s2115 + $0x34] sm:$0xf] %vm2116, %v2109
        %2131 = vst.msk [vmem:[%s2115 + $0x38] sm:$0xf] %vm2116, %v2110
        %2132 = vst.msk [vmem:[%s2115 + $0x3c] sm:$0xf] %vm2116, %v2111
      $region64: #{gnn_forward.1} parent=51 // pred_fallthru
        _
      %p2133 = scmp.eq.s32.totalorder %s23, 3
      // Predicated region
      $region65: #{gnn_forward.1} parent=51 // pred_check
        %p2134 = pneg %p2133
      $region66: #{gnn_forward.1} parent=51 // pred_check_branch
        %2136 = sbr.rel (%p2134) target = $region68
      $region67: #{gnn_forward.1} parent=51 // pred_region
        %v2137 = vld [vmem:[%s374] sm:$0xff]
        %v2138 = vld [vmem:[%s374 + $0x8] sm:$0xff]
        %v2139 = vld [vmem:[%s374 + $0x10] sm:$0xff]
        %v2140 = vld [vmem:[%s374 + $0x18] sm:$0xff]
        %v2141 = vld [vmem:[%s374 + $0x20] sm:$0xff]
        %v2142 = vld [vmem:[%s374 + $0x28] sm:$0xff]
        %v2143 = vld [vmem:[%s374 + $0x30] sm:$0xff]
        %v2144 = vld [vmem:[%s374 + $0x38] sm:$0xff]
        %v2145 = vld [vmem:[%s374 + $0x40] sm:$0xff]
        %v2146 = vld [vmem:[%s374 + $0x48] sm:$0xff]
        %v2147 = vld [vmem:[%s374 + $0x50] sm:$0xff]
        %v2148 = vld [vmem:[%s374 + $0x58] sm:$0xff]
        %v2149 = vld [vmem:[%s374 + $0x60] sm:$0xff]
        %v2150 = vld [vmem:[%s374 + $0x68] sm:$0xff]
        %v2151 = vld [vmem:[%s374 + $0x70] sm:$0xff]
        %v2152 = vld [vmem:[%s374 + $0x78] sm:$0xff]
        %v2153 = vld [vmem:[#allocation2] sm:$0xf]
        %v2154 = vld [vmem:[#allocation2 + $0x4] sm:$0xf]
        %v2155 = vld [vmem:[#allocation2 + $0x8] sm:$0xf]
        %v2156 = vld [vmem:[#allocation2 + $0xc] sm:$0xf]
        %v2157 = vld [vmem:[#allocation2 + $0x10] sm:$0xf]
        %v2158 = vld [vmem:[#allocation2 + $0x14] sm:$0xf]
        %v2159 = vld [vmem:[#allocation2 + $0x18] sm:$0xf]
        %v2160 = vld [vmem:[#allocation2 + $0x1c] sm:$0xf]
        %v2161 = vld [vmem:[#allocation2 + $0x20] sm:$0xf]
        %v2162 = vld [vmem:[#allocation2 + $0x24] sm:$0xf]
        %v2163 = vld [vmem:[#allocation2 + $0x28] sm:$0xf]
        %v2164 = vld [vmem:[#allocation2 + $0x2c] sm:$0xf]
        %v2165 = vld [vmem:[#allocation2 + $0x30] sm:$0xf]
        %v2166 = vld [vmem:[#allocation2 + $0x34] sm:$0xf]
        %v2167 = vld [vmem:[#allocation2 + $0x38] sm:$0xf]
        %v2168 = vld [vmem:[#allocation2 + $0x3c] sm:$0xf]
        %v2169 = vld [vmem:[#allocation2 + $0x40] sm:$0xf]
        %v2170 = vld [vmem:[#allocation2 + $0x44] sm:$0xf]
        %v2171 = vld [vmem:[#allocation2 + $0x48] sm:$0xf]
        %v2172 = vld [vmem:[#allocation2 + $0x4c] sm:$0xf]
        %v2173 = vld [vmem:[#allocation2 + $0x50] sm:$0xf]
        %v2174 = vld [vmem:[#allocation2 + $0x54] sm:$0xf]
        %v2175 = vld [vmem:[#allocation2 + $0x58] sm:$0xf]
        %v2176 = vld [vmem:[#allocation2 + $0x5c] sm:$0xf]
        %v2177 = vld [vmem:[#allocation2 + $0x60] sm:$0xf]
        %v2178 = vld [vmem:[#allocation2 + $0x64] sm:$0xf]
        %v2179 = vld [vmem:[#allocation2 + $0x68] sm:$0xf]
        %v2180 = vld [vmem:[#allocation2 + $0x6c] sm:$0xf]
        %v2181 = vld [vmem:[#allocation2 + $0x70] sm:$0xf]
        %v2182 = vld [vmem:[#allocation2 + $0x74] sm:$0xf]
        %v2183 = vld [vmem:[#allocation2 + $0x78] sm:$0xf]
        %v2184 = vld [vmem:[#allocation2 + $0x7c] sm:$0xf]
        %v2201 = vunpack.c.l.b16 %v2137
        %v2202 = vunpack.c.h.b16 %v2137
        %v2203 = vunpack.c.l.b16 %v2138
        %v2204 = vunpack.c.h.b16 %v2138
        %v2205 = vunpack.c.l.b16 %v2139
        %v2206 = vunpack.c.h.b16 %v2139
        %v2207 = vunpack.c.l.b16 %v2140
        %v2208 = vunpack.c.h.b16 %v2140
        %v2209 = vunpack.c.l.b16 %v2141
        %v2210 = vunpack.c.h.b16 %v2141
        %v2211 = vunpack.c.l.b16 %v2142
        %v2212 = vunpack.c.h.b16 %v2142
        %v2213 = vunpack.c.l.b16 %v2143
        %v2214 = vunpack.c.h.b16 %v2143
        %v2215 = vunpack.c.l.b16 %v2144
        %v2216 = vunpack.c.h.b16 %v2144
        %v2217 = vunpack.c.l.b16 %v2145
        %v2218 = vunpack.c.h.b16 %v2145
        %v2219 = vunpack.c.l.b16 %v2146
        %v2220 = vunpack.c.h.b16 %v2146
        %v2221 = vunpack.c.l.b16 %v2147
        %v2222 = vunpack.c.h.b16 %v2147
        %v2223 = vunpack.c.l.b16 %v2148
        %v2224 = vunpack.c.h.b16 %v2148
        %v2225 = vunpack.c.l.b16 %v2149
        %v2226 = vunpack.c.h.b16 %v2149
        %v2227 = vunpack.c.l.b16 %v2150
        %v2228 = vunpack.c.h.b16 %v2150
        %v2229 = vunpack.c.l.b16 %v2151
        %v2230 = vunpack.c.h.b16 %v2151
        %v2231 = vunpack.c.l.b16 %v2152
        %v2232 = vunpack.c.h.b16 %v2152
        %v2233 = vpack.c.b16 %v2203, %v2201
        %v2234 = vpack.c.b16 %v2204, %v2202
        %v2235 = vpack.c.b16 %v2207, %v2205
        %v2236 = vpack.c.b16 %v2208, %v2206
        %v2237 = vpack.c.b16 %v2211, %v2209
        %v2238 = vpack.c.b16 %v2212, %v2210
        %v2239 = vpack.c.b16 %v2215, %v2213
        %v2240 = vpack.c.b16 %v2216, %v2214
        %v2241 = vpack.c.b16 %v2219, %v2217
        %v2242 = vpack.c.b16 %v2220, %v2218
        %v2243 = vpack.c.b16 %v2223, %v2221
        %v2244 = vpack.c.b16 %v2224, %v2222
        %v2245 = vpack.c.b16 %v2227, %v2225
        %v2246 = vpack.c.b16 %v2228, %v2226
        %v2247 = vpack.c.b16 %v2231, %v2229
        %v2248 = vpack.c.b16 %v2232, %v2230
        %v2297 = vunpack.c.l.b16 %v2153
        %v2298 = vunpack.c.l.b16 %v2154
        %v2299 = vunpack.c.l.b16 %v2155
        %v2300 = vunpack.c.l.b16 %v2156
        %v2301 = vunpack.c.l.b16 %v2157
        %v2302 = vunpack.c.l.b16 %v2158
        %v2303 = vunpack.c.l.b16 %v2159
        %v2304 = vunpack.c.l.b16 %v2160
        %v2305 = vunpack.c.l.b16 %v2161
        %v2306 = vunpack.c.l.b16 %v2162
        %v2307 = vunpack.c.l.b16 %v2163
        %v2308 = vunpack.c.l.b16 %v2164
        %v2309 = vunpack.c.l.b16 %v2165
        %v2310 = vunpack.c.l.b16 %v2166
        %v2311 = vunpack.c.l.b16 %v2167
        %v2312 = vunpack.c.l.b16 %v2168
        %v2313 = vunpack.c.l.b16 %v2169
        %v2314 = vunpack.c.l.b16 %v2170
        %v2315 = vunpack.c.l.b16 %v2171
        %v2316 = vunpack.c.l.b16 %v2172
        %v2317 = vunpack.c.l.b16 %v2173
        %v2318 = vunpack.c.l.b16 %v2174
        %v2319 = vunpack.c.l.b16 %v2175
        %v2320 = vunpack.c.l.b16 %v2176
        %v2321 = vunpack.c.l.b16 %v2177
        %v2322 = vunpack.c.l.b16 %v2178
        %v2323 = vunpack.c.l.b16 %v2179
        %v2324 = vunpack.c.l.b16 %v2180
        %v2325 = vunpack.c.l.b16 %v2181
        %v2326 = vunpack.c.l.b16 %v2182
        %v2327 = vunpack.c.l.b16 %v2183
        %v2328 = vunpack.c.l.b16 %v2184
        %v2329 = vpack.c.b16 %v2298, %v2297
        %v2330 = vpack.c.b16 %v2300, %v2299
        %v2331 = vpack.c.b16 %v2302, %v2301
        %v2332 = vpack.c.b16 %v2304, %v2303
        %v2333 = vpack.c.b16 %v2306, %v2305
        %v2334 = vpack.c.b16 %v2308, %v2307
        %v2335 = vpack.c.b16 %v2310, %v2309
        %v2336 = vpack.c.b16 %v2312, %v2311
        %v2337 = vpack.c.b16 %v2314, %v2313
        %v2338 = vpack.c.b16 %v2316, %v2315
        %v2339 = vpack.c.b16 %v2318, %v2317
        %v2340 = vpack.c.b16 %v2320, %v2319
        %v2341 = vpack.c.b16 %v2322, %v2321
        %v2342 = vpack.c.b16 %v2324, %v2323
        %v2343 = vpack.c.b16 %v2326, %v2325
        %v2344 = vpack.c.b16 %v2328, %v2327
        %2361 = vmatpush.bf16.msra.mxu0 %v2336
        %2362 = vmatpush.bf16.msra.mxu0 %v2335
        %2363 = vmatpush.bf16.msra.mxu0 %v2334
        %2364 = vmatpush.bf16.msra.mxu0 %v2333
        %2365 = vmatpush.bf16.msra.mxu0 %v2332
        %2366 = vmatpush.bf16.msra.mxu0 %v2331
        %2367 = vmatpush.bf16.msra.mxu0 %v2330
        %2368 = vmatpush.bf16.msra.mxu0 %v2329
        %2369 = vmatmul.bf16.gmra.mxu0 %v2233
        %v2370 = vpop.f32.mrf.mxu0
        %v2371 = vadd.f32 0.0, %v2370
        %v2372 = vpop.f32.mrf.mxu0
        %v2373 = vadd.f32 0.0, %v2372
        %2374 = vmatmul.bf16.gmra.mxu0 %v2235
        %v2375 = vpop.f32.mrf.mxu0
        %v2376 = vadd.f32 0.0, %v2375
        %v2377 = vpop.f32.mrf.mxu0
        %v2378 = vadd.f32 0.0, %v2377
        %2379 = vmatmul.bf16.gmra.mxu0 %v2237
        %v2380 = vpop.f32.mrf.mxu0
        %v2381 = vadd.f32 0.0, %v2380
        %v2382 = vpop.f32.mrf.mxu0
        %v2383 = vadd.f32 0.0, %v2382
        %2384 = vmatmul.bf16.gmra.mxu0 %v2239
        %v2385 = vpop.f32.mrf.mxu0
        %v2386 = vadd.f32 0.0, %v2385
        %v2387 = vpop.f32.mrf.mxu0
        %v2388 = vadd.f32 0.0, %v2387
        %2389 = vmatmul.bf16.gmra.mxu0 %v2241
        %v2390 = vpop.f32.mrf.mxu0
        %v2391 = vadd.f32 0.0, %v2390
        %v2392 = vpop.f32.mrf.mxu0
        %v2393 = vadd.f32 0.0, %v2392
        %2394 = vmatmul.bf16.gmra.mxu0 %v2243
        %v2395 = vpop.f32.mrf.mxu0
        %v2396 = vadd.f32 0.0, %v2395
        %v2397 = vpop.f32.mrf.mxu0
        %v2398 = vadd.f32 0.0, %v2397
        %2399 = vmatmul.bf16.gmra.mxu0 %v2245
        %v2400 = vpop.f32.mrf.mxu0
        %v2401 = vadd.f32 0.0, %v2400
        %v2402 = vpop.f32.mrf.mxu0
        %v2403 = vadd.f32 0.0, %v2402
        %2404 = vmatmul.bf16.gmra.mxu0 %v2247
        %v2405 = vpop.f32.mrf.mxu0
        %v2406 = vadd.f32 0.0, %v2405
        %v2407 = vpop.f32.mrf.mxu0
        %v2408 = vadd.f32 0.0, %v2407
        %2409 = vdwg.mxu0
        %2410 = vmatpush.bf16.msra.mxu0 %v2344
        %2411 = vmatpush.bf16.msra.mxu0 %v2343
        %2412 = vmatpush.bf16.msra.mxu0 %v2342
        %2413 = vmatpush.bf16.msra.mxu0 %v2341
        %2414 = vmatpush.bf16.msra.mxu0 %v2340
        %2415 = vmatpush.bf16.msra.mxu0 %v2339
        %2416 = vmatpush.bf16.msra.mxu0 %v2338
        %2417 = vmatpush.bf16.msra.mxu0 %v2337
        %2418 = vmatmul.bf16.gmra.mxu0 %v2234
        %v2419 = vpop.f32.mrf.mxu0
        %v2420 = vadd.f32 %v2371, %v2419
        %v2421 = vpop.f32.mrf.mxu0
        %v2422 = vadd.f32 %v2373, %v2421
        %2423 = vmatmul.bf16.gmra.mxu0 %v2236
        %v2424 = vpop.f32.mrf.mxu0
        %v2425 = vadd.f32 %v2376, %v2424
        %v2426 = vpop.f32.mrf.mxu0
        %v2427 = vadd.f32 %v2378, %v2426
        %2428 = vmatmul.bf16.gmra.mxu0 %v2238
        %v2429 = vpop.f32.mrf.mxu0
        %v2430 = vadd.f32 %v2381, %v2429
        %v2431 = vpop.f32.mrf.mxu0
        %v2432 = vadd.f32 %v2383, %v2431
        %2433 = vmatmul.bf16.gmra.mxu0 %v2240
        %v2434 = vpop.f32.mrf.mxu0
        %v2435 = vadd.f32 %v2386, %v2434
        %v2436 = vpop.f32.mrf.mxu0
        %v2437 = vadd.f32 %v2388, %v2436
        %2438 = vmatmul.bf16.gmra.mxu0 %v2242
        %v2439 = vpop.f32.mrf.mxu0
        %v2440 = vadd.f32 %v2391, %v2439
        %v2441 = vpop.f32.mrf.mxu0
        %v2442 = vadd.f32 %v2393, %v2441
        %2443 = vmatmul.bf16.gmra.mxu0 %v2244
        %v2444 = vpop.f32.mrf.mxu0
        %v2445 = vadd.f32 %v2396, %v2444
        %v2446 = vpop.f32.mrf.mxu0
        %v2447 = vadd.f32 %v2398, %v2446
        %2448 = vmatmul.bf16.gmra.mxu0 %v2246
        %v2449 = vpop.f32.mrf.mxu0
        %v2450 = vadd.f32 %v2401, %v2449
        %v2451 = vpop.f32.mrf.mxu0
        %v2452 = vadd.f32 %v2403, %v2451
        %2453 = vmatmul.bf16.gmra.mxu0 %v2248
        %v2454 = vpop.f32.mrf.mxu0
        %v2455 = vadd.f32 %v2406, %v2454
        %v2456 = vpop.f32.mrf.mxu0
        %v2457 = vadd.f32 %v2408, %v2456
        %2458 = vdwg.mxu0
        %v2459 = vpack.c.bf16 %v2422, %v2420
        %v2460 = vpack.c.bf16 %v2427, %v2425
        %v2461 = vpack.c.bf16 %v2432, %v2430
        %v2462 = vpack.c.bf16 %v2437, %v2435
        %v2463 = vpack.c.bf16 %v2442, %v2440
        %v2464 = vpack.c.bf16 %v2447, %v2445
        %v2465 = vpack.c.bf16 %v2452, %v2450
        %v2466 = vpack.c.bf16 %v2457, %v2455
        %v2467 = vld [vmem:[%s6] sm:$0xff]
        %v2468 = vld [vmem:[%s6 + $0x8] sm:$0xff]
        %v2469 = vld [vmem:[%s6 + $0x10] sm:$0xf]
        %v2470 = vld [vmem:[%s6 + $0x14] sm:$0xff]
        %v2471 = vld [vmem:[%s6 + $0x1c] sm:$0xff]
        %v2472 = vld [vmem:[%s6 + $0x24] sm:$0xf]
        %v2473 = vld [vmem:[%s6 + $0x28] sm:$0xff]
        %v2474 = vld [vmem:[%s6 + $0x30] sm:$0xff]
        %v2475 = vld [vmem:[%s6 + $0x38] sm:$0xf]
        %v2476 = vld [vmem:[%s6 + $0x3c] sm:$0xff]
        %v2477 = vld [vmem:[%s6 + $0x44] sm:$0xff]
        %v2478 = vld [vmem:[%s6 + $0x4c] sm:$0xf]
        %v2479 = vld [vmem:[%s6 + $0x50] sm:$0xff]
        %v2480 = vld [vmem:[%s6 + $0x58] sm:$0xff]
        %v2481 = vld [vmem:[%s6 + $0x60] sm:$0xf]
        %v2482 = vld [vmem:[%s6 + $0x64] sm:$0xff]
        %v2483 = vld [vmem:[%s6 + $0x6c] sm:$0xff]
        %v2484 = vld [vmem:[%s6 + $0x74] sm:$0xf]
        %v2485 = vld [vmem:[%s6 + $0x78] sm:$0xff]
        %v2486 = vld [vmem:[%s6 + $0x80] sm:$0xff]
        %v2487 = vld [vmem:[%s6 + $0x88] sm:$0xf]
        %v2488 = vld [vmem:[%s6 + $0x8c] sm:$0xff]
        %v2489 = vld [vmem:[%s6 + $0x94] sm:$0xff]
        %v2490 = vld [vmem:[%s6 + $0x9c] sm:$0xf]
        %v2491 = vld [vmem:[%s7] sm:$0x1f]
        %v2493 = vperm.slane %v2491, 0
        %v2494 = vperm.slane %v2491, 1
        %v2495 = vperm.slane %v2491, 2
        %v2496 = vperm.slane %v2491, 3
        %v2497 = vperm.slane %v2491, 4
        %v2527 = vunpack.c.l.b16 %v2467
        %v2528 = vunpack.c.h.b16 %v2467
        %v2529 = vunpack.c.l.b16 %v2468
        %v2530 = vunpack.c.h.b16 %v2468
        %v2531 = vunpack.c.l.b16 %v2469
        %v2532 = vunpack.c.l.b16 %v2470
        %v2533 = vunpack.c.h.b16 %v2470
        %v2534 = vunpack.c.l.b16 %v2471
        %v2535 = vunpack.c.h.b16 %v2471
        %v2536 = vunpack.c.l.b16 %v2472
        %v2537 = vunpack.c.l.b16 %v2473
        %v2538 = vunpack.c.h.b16 %v2473
        %v2539 = vunpack.c.l.b16 %v2474
        %v2540 = vunpack.c.h.b16 %v2474
        %v2541 = vunpack.c.l.b16 %v2475
        %v2542 = vunpack.c.l.b16 %v2476
        %v2543 = vunpack.c.h.b16 %v2476
        %v2544 = vunpack.c.l.b16 %v2477
        %v2545 = vunpack.c.h.b16 %v2477
        %v2546 = vunpack.c.l.b16 %v2478
        %v2547 = vunpack.c.l.b16 %v2479
        %v2548 = vunpack.c.h.b16 %v2479
        %v2549 = vunpack.c.l.b16 %v2480
        %v2550 = vunpack.c.h.b16 %v2480
        %v2551 = vunpack.c.l.b16 %v2481
        %v2552 = vunpack.c.l.b16 %v2482
        %v2553 = vunpack.c.h.b16 %v2482
        %v2554 = vunpack.c.l.b16 %v2483
        %v2555 = vunpack.c.h.b16 %v2483
        %v2556 = vunpack.c.l.b16 %v2484
        %v2557 = vunpack.c.l.b16 %v2485
        %v2558 = vunpack.c.h.b16 %v2485
        %v2559 = vunpack.c.l.b16 %v2486
        %v2560 = vunpack.c.h.b16 %v2486
        %v2561 = vunpack.c.l.b16 %v2487
        %v2562 = vunpack.c.l.b16 %v2488
        %v2563 = vunpack.c.h.b16 %v2488
        %v2564 = vunpack.c.l.b16 %v2489
        %v2565 = vunpack.c.h.b16 %v2489
        %v2566 = vunpack.c.l.b16 %v2490
        %v2567 = vpack.c.b16 %v2532, %v2527
        %v2568 = vpack.c.b16 %v2533, %v2528
        %v2569 = vpack.c.b16 %v2534, %v2529
        %v2570 = vpack.c.b16 %v2535, %v2530
        %v2571 = vpack.c.b16 %v2536, %v2531
        %v2572 = vpack.c.b16 %v2542, %v2537
        %v2573 = vpack.c.b16 %v2543, %v2538
        %v2574 = vpack.c.b16 %v2544, %v2539
        %v2575 = vpack.c.b16 %v2545, %v2540
        %v2576 = vpack.c.b16 %v2546, %v2541
        %v2577 = vpack.c.b16 %v2552, %v2547
        %v2578 = vpack.c.b16 %v2553, %v2548
        %v2579 = vpack.c.b16 %v2554, %v2549
        %v2580 = vpack.c.b16 %v2555, %v2550
        %v2581 = vpack.c.b16 %v2556, %v2551
        %v2582 = vpack.c.b16 %v2562, %v2557
        %v2583 = vpack.c.b16 %v2563, %v2558
        %v2584 = vpack.c.b16 %v2564, %v2559
        %v2585 = vpack.c.b16 %v2565, %v2560
        %v2586 = vpack.c.b16 %v2566, %v2561
        %vm2607 = vcmask 523264
        %v2609 = vsel %vm2607, %v2459, 0
        %v2612 = vsel %vm2607, %v2460, 0
        %v2615 = vsel %vm2607, %v2461, 0
        %v2618 = vsel %vm2607, %v2462, 0
        %v2621 = vsel %vm2607, %v2463, 0
        %v2624 = vsel %vm2607, %v2464, 0
        %v2627 = vsel %vm2607, %v2465, 0
        %v2630 = vsel %vm2607, %v2466, 0
        %2632 = vmatpush.bf16.msra.mxu0 0
        %2633 = vmatpush.bf16.msra.mxu0 0
        %2634 = vmatpush.bf16.msra.mxu0 0
        %2635 = vmatpush.bf16.msra.mxu0 0
        %2636 = vmatpush.bf16.msra.mxu0 %v2582
        %2637 = vmatpush.bf16.msra.mxu0 %v2577
        %2638 = vmatpush.bf16.msra.mxu0 %v2572
        %2639 = vmatpush.bf16.msra.mxu0 %v2567
        %2640 = vmatmul.bf16.gmra.mxu0 %v2609
        %v2641 = vpop.f32.mrf.mxu0
        %v2642 = vadd.f32 %v2493, %v2641
        %v2643 = vpop.f32.mrf.mxu0
        %v2644 = vadd.f32 %v2493, %v2643
        %2645 = vmatmul.bf16.gmra.mxu0 %v2612
        %v2646 = vpop.f32.mrf.mxu0
        %v2647 = vadd.f32 %v2493, %v2646
        %v2648 = vpop.f32.mrf.mxu0
        %v2649 = vadd.f32 %v2493, %v2648
        %2650 = vmatmul.bf16.gmra.mxu0 %v2615
        %v2651 = vpop.f32.mrf.mxu0
        %v2652 = vadd.f32 %v2493, %v2651
        %v2653 = vpop.f32.mrf.mxu0
        %v2654 = vadd.f32 %v2493, %v2653
        %2655 = vmatmul.bf16.gmra.mxu0 %v2618
        %v2656 = vpop.f32.mrf.mxu0
        %v2657 = vadd.f32 %v2493, %v2656
        %v2658 = vpop.f32.mrf.mxu0
        %v2659 = vadd.f32 %v2493, %v2658
        %2660 = vmatmul.bf16.gmra.mxu0 %v2621
        %v2661 = vpop.f32.mrf.mxu0
        %v2662 = vadd.f32 %v2493, %v2661
        %v2663 = vpop.f32.mrf.mxu0
        %v2664 = vadd.f32 %v2493, %v2663
        %2665 = vmatmul.bf16.gmra.mxu0 %v2624
        %v2666 = vpop.f32.mrf.mxu0
        %v2667 = vadd.f32 %v2493, %v2666
        %v2668 = vpop.f32.mrf.mxu0
        %v2669 = vadd.f32 %v2493, %v2668
        %2670 = vmatmul.bf16.gmra.mxu0 %v2627
        %v2671 = vpop.f32.mrf.mxu0
        %v2672 = vadd.f32 %v2493, %v2671
        %v2673 = vpop.f32.mrf.mxu0
        %v2674 = vadd.f32 %v2493, %v2673
        %2675 = vmatmul.bf16.gmra.mxu0 %v2630
        %v2676 = vpop.f32.mrf.mxu0
        %v2677 = vadd.f32 %v2493, %v2676
        %v2678 = vpop.f32.mrf.mxu0
        %v2679 = vadd.f32 %v2493, %v2678
        %2680 = vdwg.mxu0
        %2681 = vmatpush.bf16.msra.mxu0 0
        %2682 = vmatpush.bf16.msra.mxu0 0
        %2683 = vmatpush.bf16.msra.mxu0 0
        %2684 = vmatpush.bf16.msra.mxu0 0
        %2685 = vmatpush.bf16.msra.mxu0 %v2583
        %2686 = vmatpush.bf16.msra.mxu0 %v2578
        %2687 = vmatpush.bf16.msra.mxu0 %v2573
        %2688 = vmatpush.bf16.msra.mxu0 %v2568
        %2689 = vmatmul.bf16.gmra.mxu0 %v2609
        %v2690 = vpop.f32.mrf.mxu0
        %v2691 = vadd.f32 %v2494, %v2690
        %v2692 = vpop.f32.mrf.mxu0
        %v2693 = vadd.f32 %v2494, %v2692
        %2694 = vmatmul.bf16.gmra.mxu0 %v2612
        %v2695 = vpop.f32.mrf.mxu0
        %v2696 = vadd.f32 %v2494, %v2695
        %v2697 = vpop.f32.mrf.mxu0
        %v2698 = vadd.f32 %v2494, %v2697
        %2699 = vmatmul.bf16.gmra.mxu0 %v2615
        %v2700 = vpop.f32.mrf.mxu0
        %v2701 = vadd.f32 %v2494, %v2700
        %v2702 = vpop.f32.mrf.mxu0
        %v2703 = vadd.f32 %v2494, %v2702
        %2704 = vmatmul.bf16.gmra.mxu0 %v2618
        %v2705 = vpop.f32.mrf.mxu0
        %v2706 = vadd.f32 %v2494, %v2705
        %v2707 = vpop.f32.mrf.mxu0
        %v2708 = vadd.f32 %v2494, %v2707
        %2709 = vmatmul.bf16.gmra.mxu0 %v2621
        %v2710 = vpop.f32.mrf.mxu0
        %v2711 = vadd.f32 %v2494, %v2710
        %v2712 = vpop.f32.mrf.mxu0
        %v2713 = vadd.f32 %v2494, %v2712
        %2714 = vmatmul.bf16.gmra.mxu0 %v2624
        %v2715 = vpop.f32.mrf.mxu0
        %v2716 = vadd.f32 %v2494, %v2715
        %v2717 = vpop.f32.mrf.mxu0
        %v2718 = vadd.f32 %v2494, %v2717
        %2719 = vmatmul.bf16.gmra.mxu0 %v2627
        %v2720 = vpop.f32.mrf.mxu0
        %v2721 = vadd.f32 %v2494, %v2720
        %v2722 = vpop.f32.mrf.mxu0
        %v2723 = vadd.f32 %v2494, %v2722
        %2724 = vmatmul.bf16.gmra.mxu0 %v2630
        %v2725 = vpop.f32.mrf.mxu0
        %v2726 = vadd.f32 %v2494, %v2725
        %v2727 = vpop.f32.mrf.mxu0
        %v2728 = vadd.f32 %v2494, %v2727
        %2729 = vdwg.mxu0
        %2730 = vmatpush.bf16.msra.mxu0 0
        %2731 = vmatpush.bf16.msra.mxu0 0
        %2732 = vmatpush.bf16.msra.mxu0 0
        %2733 = vmatpush.bf16.msra.mxu0 0
        %2734 = vmatpush.bf16.msra.mxu0 %v2584
        %2735 = vmatpush.bf16.msra.mxu0 %v2579
        %2736 = vmatpush.bf16.msra.mxu0 %v2574
        %2737 = vmatpush.bf16.msra.mxu0 %v2569
        %2738 = vmatmul.bf16.gmra.mxu0 %v2609
        %v2739 = vpop.f32.mrf.mxu0
        %v2740 = vadd.f32 %v2495, %v2739
        %v2741 = vpop.f32.mrf.mxu0
        %v2742 = vadd.f32 %v2495, %v2741
        %2743 = vmatmul.bf16.gmra.mxu0 %v2612
        %v2744 = vpop.f32.mrf.mxu0
        %v2745 = vadd.f32 %v2495, %v2744
        %v2746 = vpop.f32.mrf.mxu0
        %v2747 = vadd.f32 %v2495, %v2746
        %2748 = vmatmul.bf16.gmra.mxu0 %v2615
        %v2749 = vpop.f32.mrf.mxu0
        %v2750 = vadd.f32 %v2495, %v2749
        %v2751 = vpop.f32.mrf.mxu0
        %v2752 = vadd.f32 %v2495, %v2751
        %2753 = vmatmul.bf16.gmra.mxu0 %v2618
        %v2754 = vpop.f32.mrf.mxu0
        %v2755 = vadd.f32 %v2495, %v2754
        %v2756 = vpop.f32.mrf.mxu0
        %v2757 = vadd.f32 %v2495, %v2756
        %2758 = vmatmul.bf16.gmra.mxu0 %v2621
        %v2759 = vpop.f32.mrf.mxu0
        %v2760 = vadd.f32 %v2495, %v2759
        %v2761 = vpop.f32.mrf.mxu0
        %v2762 = vadd.f32 %v2495, %v2761
        %2763 = vmatmul.bf16.gmra.mxu0 %v2624
        %v2764 = vpop.f32.mrf.mxu0
        %v2765 = vadd.f32 %v2495, %v2764
        %v2766 = vpop.f32.mrf.mxu0
        %v2767 = vadd.f32 %v2495, %v2766
        %2768 = vmatmul.bf16.gmra.mxu0 %v2627
        %v2769 = vpop.f32.mrf.mxu0
        %v2770 = vadd.f32 %v2495, %v2769
        %v2771 = vpop.f32.mrf.mxu0
        %v2772 = vadd.f32 %v2495, %v2771
        %2773 = vmatmul.bf16.gmra.mxu0 %v2630
        %v2774 = vpop.f32.mrf.mxu0
        %v2775 = vadd.f32 %v2495, %v2774
        %v2776 = vpop.f32.mrf.mxu0
        %v2777 = vadd.f32 %v2495, %v2776
        %2778 = vdwg.mxu0
        %2779 = vmatpush.bf16.msra.mxu0 0
        %2780 = vmatpush.bf16.msra.mxu0 0
        %2781 = vmatpush.bf16.msra.mxu0 0
        %2782 = vmatpush.bf16.msra.mxu0 0
        %2783 = vmatpush.bf16.msra.mxu0 %v2585
        %2784 = vmatpush.bf16.msra.mxu0 %v2580
        %2785 = vmatpush.bf16.msra.mxu0 %v2575
        %2786 = vmatpush.bf16.msra.mxu0 %v2570
        %2787 = vmatmul.bf16.gmra.mxu0 %v2609
        %v2788 = vpop.f32.mrf.mxu0
        %v2789 = vadd.f32 %v2496, %v2788
        %v2790 = vpop.f32.mrf.mxu0
        %v2791 = vadd.f32 %v2496, %v2790
        %2792 = vmatmul.bf16.gmra.mxu0 %v2612
        %v2793 = vpop.f32.mrf.mxu0
        %v2794 = vadd.f32 %v2496, %v2793
        %v2795 = vpop.f32.mrf.mxu0
        %v2796 = vadd.f32 %v2496, %v2795
        %2797 = vmatmul.bf16.gmra.mxu0 %v2615
        %v2798 = vpop.f32.mrf.mxu0
        %v2799 = vadd.f32 %v2496, %v2798
        %v2800 = vpop.f32.mrf.mxu0
        %v2801 = vadd.f32 %v2496, %v2800
        %2802 = vmatmul.bf16.gmra.mxu0 %v2618
        %v2803 = vpop.f32.mrf.mxu0
        %v2804 = vadd.f32 %v2496, %v2803
        %v2805 = vpop.f32.mrf.mxu0
        %v2806 = vadd.f32 %v2496, %v2805
        %2807 = vmatmul.bf16.gmra.mxu0 %v2621
        %v2808 = vpop.f32.mrf.mxu0
        %v2809 = vadd.f32 %v2496, %v2808
        %v2810 = vpop.f32.mrf.mxu0
        %v2811 = vadd.f32 %v2496, %v2810
        %2812 = vmatmul.bf16.gmra.mxu0 %v2624
        %v2813 = vpop.f32.mrf.mxu0
        %v2814 = vadd.f32 %v2496, %v2813
        %v2815 = vpop.f32.mrf.mxu0
        %v2816 = vadd.f32 %v2496, %v2815
        %2817 = vmatmul.bf16.gmra.mxu0 %v2627
        %v2818 = vpop.f32.mrf.mxu0
        %v2819 = vadd.f32 %v2496, %v2818
        %v2820 = vpop.f32.mrf.mxu0
        %v2821 = vadd.f32 %v2496, %v2820
        %2822 = vmatmul.bf16.gmra.mxu0 %v2630
        %v2823 = vpop.f32.mrf.mxu0
        %v2824 = vadd.f32 %v2496, %v2823
        %v2825 = vpop.f32.mrf.mxu0
        %v2826 = vadd.f32 %v2496, %v2825
        %2827 = vdwg.mxu0
        %2828 = vmatpush.bf16.msra.mxu0 0
        %2829 = vmatpush.bf16.msra.mxu0 0
        %2830 = vmatpush.bf16.msra.mxu0 0
        %2831 = vmatpush.bf16.msra.mxu0 0
        %2832 = vmatpush.bf16.msra.mxu0 %v2586
        %2833 = vmatpush.bf16.msra.mxu0 %v2581
        %2834 = vmatpush.bf16.msra.mxu0 %v2576
        %2835 = vmatpush.bf16.msra.mxu0 %v2571
        %2836 = vmatmul.bf16.gmra.mxu0 %v2609
        %v2837 = vpop.f32.mrf.mxu0
        %v2838 = vadd.f32 %v2497, %v2837
        %v2839 = vpop.f32.mrf.mxu0
        %v2840 = vadd.f32 %v2497, %v2839
        %2841 = vmatmul.bf16.gmra.mxu0 %v2612
        %v2842 = vpop.f32.mrf.mxu0
        %v2843 = vadd.f32 %v2497, %v2842
        %v2844 = vpop.f32.mrf.mxu0
        %v2845 = vadd.f32 %v2497, %v2844
        %2846 = vmatmul.bf16.gmra.mxu0 %v2615
        %v2847 = vpop.f32.mrf.mxu0
        %v2848 = vadd.f32 %v2497, %v2847
        %v2849 = vpop.f32.mrf.mxu0
        %v2850 = vadd.f32 %v2497, %v2849
        %2851 = vmatmul.bf16.gmra.mxu0 %v2618
        %v2852 = vpop.f32.mrf.mxu0
        %v2853 = vadd.f32 %v2497, %v2852
        %v2854 = vpop.f32.mrf.mxu0
        %v2855 = vadd.f32 %v2497, %v2854
        %2856 = vmatmul.bf16.gmra.mxu0 %v2621
        %v2857 = vpop.f32.mrf.mxu0
        %v2858 = vadd.f32 %v2497, %v2857
        %v2859 = vpop.f32.mrf.mxu0
        %v2860 = vadd.f32 %v2497, %v2859
        %2861 = vmatmul.bf16.gmra.mxu0 %v2624
        %v2862 = vpop.f32.mrf.mxu0
        %v2863 = vadd.f32 %v2497, %v2862
        %v2864 = vpop.f32.mrf.mxu0
        %v2865 = vadd.f32 %v2497, %v2864
        %2866 = vmatmul.bf16.gmra.mxu0 %v2627
        %v2867 = vpop.f32.mrf.mxu0
        %v2868 = vadd.f32 %v2497, %v2867
        %v2869 = vpop.f32.mrf.mxu0
        %v2870 = vadd.f32 %v2497, %v2869
        %2871 = vmatmul.bf16.gmra.mxu0 %v2630
        %v2872 = vpop.f32.mrf.mxu0
        %v2873 = vadd.f32 %v2497, %v2872
        %v2874 = vpop.f32.mrf.mxu0
        %v2875 = vadd.f32 %v2497, %v2874
        %2876 = vdwg.mxu0
        %2877 = vst [vmem:[%s385] sm:$0xff] %v2642
        %2878 = vst [vmem:[%s385 + $0x8] sm:$0xff] %v2691
        %2879 = vst [vmem:[%s385 + $0x10] sm:$0xff] %v2740
        %2880 = vst [vmem:[%s385 + $0x18] sm:$0xff] %v2789
        %2881 = vst [vmem:[%s385 + $0x20] sm:$0xff] %v2838
        %2882 = vst [vmem:[%s385 + $0x28] sm:$0xff] %v2644
        %2883 = vst [vmem:[%s385 + $0x30] sm:$0xff] %v2693
        %2884 = vst [vmem:[%s385 + $0x38] sm:$0xff] %v2742
        %2885 = vst [vmem:[%s385 + $0x40] sm:$0xff] %v2791
        %2886 = vst [vmem:[%s385 + $0x48] sm:$0xff] %v2840
        %2887 = vst [vmem:[%s385 + $0x50] sm:$0xff] %v2647
        %2888 = vst [vmem:[%s385 + $0x58] sm:$0xff] %v2696
        %2889 = vst [vmem:[%s385 + $0x60] sm:$0xff] %v2745
        %2890 = vst [vmem:[%s385 + $0x68] sm:$0xff] %v2794
        %2891 = vst [vmem:[%s385 + $0x70] sm:$0xff] %v2843
        %2892 = vst [vmem:[%s385 + $0x78] sm:$0xff] %v2649
        %2893 = vst [vmem:[%s385 + $0x80] sm:$0xff] %v2698
        %2894 = vst [vmem:[%s385 + $0x88] sm:$0xff] %v2747
        %2895 = vst [vmem:[%s385 + $0x90] sm:$0xff] %v2796
        %2896 = vst [vmem:[%s385 + $0x98] sm:$0xff] %v2845
        %2897 = vst [vmem:[%s385 + $0xa0] sm:$0xff] %v2652
        %2898 = vst [vmem:[%s385 + $0xa8] sm:$0xff] %v2701
        %2899 = vst [vmem:[%s385 + $0xb0] sm:$0xff] %v2750
        %2900 = vst [vmem:[%s385 + $0xb8] sm:$0xff] %v2799
        %2901 = vst [vmem:[%s385 + $0xc0] sm:$0xff] %v2848
        %2902 = vst [vmem:[%s385 + $0xc8] sm:$0xff] %v2654
        %2903 = vst [vmem:[%s385 + $0xd0] sm:$0xff] %v2703
        %2904 = vst [vmem:[%s385 + $0xd8] sm:$0xff] %v2752
        %2905 = vst [vmem:[%s385 + $0xe0] sm:$0xff] %v2801
        %2906 = vst [vmem:[%s385 + $0xe8] sm:$0xff] %v2850
        %2907 = vst [vmem:[%s385 + $0xf0] sm:$0xff] %v2657
        %2908 = vst [vmem:[%s385 + $0xf8] sm:$0xff] %v2706
        %2909 = vst [vmem:[%s385 + $0x100] sm:$0xff] %v2755
        %2910 = vst [vmem:[%s385 + $0x108] sm:$0xff] %v2804
        %2911 = vst [vmem:[%s385 + $0x110] sm:$0xff] %v2853
        %2912 = vst [vmem:[%s385 + $0x118] sm:$0xff] %v2659
        %2913 = vst [vmem:[%s385 + $0x120] sm:$0xff] %v2708
        %2914 = vst [vmem:[%s385 + $0x128] sm:$0xff] %v2757
        %2915 = vst [vmem:[%s385 + $0x130] sm:$0xff] %v2806
        %2916 = vst [vmem:[%s385 + $0x138] sm:$0xff] %v2855
        %2917 = vst [vmem:[%s385 + $0x140] sm:$0xff] %v2662
        %2918 = vst [vmem:[%s385 + $0x148] sm:$0xff] %v2711
        %2919 = vst [vmem:[%s385 + $0x150] sm:$0xff] %v2760
        %2920 = vst [vmem:[%s385 + $0x158] sm:$0xff] %v2809
        %2921 = vst [vmem:[%s385 + $0x160] sm:$0xff] %v2858
        %2922 = vst [vmem:[%s385 + $0x168] sm:$0xff] %v2664
        %2923 = vst [vmem:[%s385 + $0x170] sm:$0xff] %v2713
        %2924 = vst [vmem:[%s385 + $0x178] sm:$0xff] %v2762
        %2925 = vst [vmem:[%s385 + $0x180] sm:$0xff] %v2811
        %2926 = vst [vmem:[%s385 + $0x188] sm:$0xff] %v2860
        %2927 = vst [vmem:[%s385 + $0x190] sm:$0xff] %v2667
        %2928 = vst [vmem:[%s385 + $0x198] sm:$0xff] %v2716
        %2929 = vst [vmem:[%s385 + $0x1a0] sm:$0xff] %v2765
        %2930 = vst [vmem:[%s385 + $0x1a8] sm:$0xff] %v2814
        %2931 = vst [vmem:[%s385 + $0x1b0] sm:$0xff] %v2863
        %2932 = vst [vmem:[%s385 + $0x1b8] sm:$0xff] %v2669
        %2933 = vst [vmem:[%s385 + $0x1c0] sm:$0xff] %v2718
        %2934 = vst [vmem:[%s385 + $0x1c8] sm:$0xff] %v2767
        %2935 = vst [vmem:[%s385 + $0x1d0] sm:$0xff] %v2816
        %2936 = vst [vmem:[%s385 + $0x1d8] sm:$0xff] %v2865
        %2937 = vst [vmem:[%s385 + $0x1e0] sm:$0xff] %v2672
        %2938 = vst [vmem:[%s385 + $0x1e8] sm:$0xff] %v2721
        %2939 = vst [vmem:[%s385 + $0x1f0] sm:$0xff] %v2770
        %2940 = vst [vmem:[%s385 + $0x1f8] sm:$0xff] %v2819
        %2941 = vst [vmem:[%s385 + $0x200] sm:$0xff] %v2868
        %2942 = vst [vmem:[%s385 + $0x208] sm:$0xff] %v2674
        %2943 = vst [vmem:[%s385 + $0x210] sm:$0xff] %v2723
        %2944 = vst [vmem:[%s385 + $0x218] sm:$0xff] %v2772
        %2945 = vst [vmem:[%s385 + $0x220] sm:$0xff] %v2821
        %2946 = vst [vmem:[%s385 + $0x228] sm:$0xff] %v2870
        %2947 = vst [vmem:[%s385 + $0x230] sm:$0xff] %v2677
        %2948 = vst [vmem:[%s385 + $0x238] sm:$0xff] %v2726
        %2949 = vst [vmem:[%s385 + $0x240] sm:$0xff] %v2775
        %2950 = vst [vmem:[%s385 + $0x248] sm:$0xff] %v2824
        %2951 = vst [vmem:[%s385 + $0x250] sm:$0xff] %v2873
        %2952 = vst [vmem:[%s385 + $0x258] sm:$0xff] %v2679
        %2953 = vst [vmem:[%s385 + $0x260] sm:$0xff] %v2728
        %2954 = vst [vmem:[%s385 + $0x268] sm:$0xff] %v2777
        %2955 = vst [vmem:[%s385 + $0x270] sm:$0xff] %v2826
        %2956 = vst [vmem:[%s385 + $0x278] sm:$0xff] %v2875
      $region68: #{gnn_forward.1} parent=51 // pred_fallthru
        _
      %p2957 = scmp.eq.s32.totalorder %s23, 3
      %s2958 = scalar_select %p2957, %s24, 0
      %s2959 = smul.u32 16, %s2958
      %p2960 = scmp.lt.s32.totalorder %s2959, 31
      %s2961 = scalar_select %p2960, %s2959, 31
      %s2962 = smul.addr %s2961, 5
      %s2963 = smul.addr %s2962, 8
      %s2964 = scalar_lea.vmem %s8, %s2963
      // Predicated region
      $region69: #{gnn_forward.1} parent=51 // pred_check
        %p2965 = pneg %p239
      $region70: #{gnn_forward.1} parent=51 // pred_check_branch
        %2967 = sbr.rel (%p2965) target = $region72
      $region71: #{gnn_forward.1} parent=51 // pred_region
        %p2968 = scmp.eq.s32.totalorder %s23, 3
        %s2969 = scalar_select %p2968, %s24, 0
        %s2970 = smul.u32 16, %s2969
      $region72: #{gnn_forward.1} parent=51 // pred_fallthru
        _
    $region52: #{gnn_forward.1} parent=5 // pred_fallthru
      _
    %p2971 = scmp.le.s32.totalorder 2, %s14
    // Predicated region
    $region73: #{gnn_forward.1} parent=5 // pred_check
      %p2972 = pneg %p2971
    $region74: #{gnn_forward.1} parent=5 // pred_check_branch
      %2974 = sbr.rel (%p2972) target = $region76
    $region75: #{gnn_forward.1} parent=5 // pred_region
      %s2975 = ssub.s32 %s14, 2
      // Predicated region
      $region77: #{gnn_forward.1} parent=75 // pred_check
        %p2976 = pneg %p245
      $region78: #{gnn_forward.1} parent=75 // pred_check_branch
        %2978 = sbr.rel (%p2976) target = $region80
      $region79: #{gnn_forward.1} parent=75 // pred_region
        %p2979 = scmp.eq.s32.totalorder %s25, 3
        %s2980 = scalar_select %p2979, %s26, 0
        %s2981 = smul.u32 16, %s2980
        %p2982 = scmp.lt.s32.totalorder %s2981, 31
        %s2983 = scalar_select %p2982, %s2981, 31
        %s2984 = smul.addr %s2983, 5
        %s2985 = smul.addr %s2984, 8
        %s2986 = scalar_lea.vmem %s8, %s2985
      $region80: #{gnn_forward.1} parent=75 // pred_fallthru
        _
    $region76: #{gnn_forward.1} parent=5 // pred_fallthru
      _
  $region6: #{gnn_forward.1} parent=0 // loop_footer
    %s18 = sadd.s32 1, %s14
  $region7: #{gnn_forward.1} parent=0 // loop_footer_branch
    %13 = sbr.rel target = $region3
  $region8: #{gnn_forward.1} parent=0 // loop_exit
    _

</llo_original>
